<compile_context>
chip_gen: v5e
topology: v5e:2x2
jax: 0.10.0
libtpu: 0.0.40
codegen_flags: <defaults>
</compile_context>

<pallas_src>
import math
import functools

import jax
import jax.numpy as jnp
from jax.experimental import pallas as pl
from jax.experimental.pallas import tpu as pltpu

_EPS = 1e-15                     # torch_geometric dense_mincut_pool EPS
_VMEM_LIMIT = 32 * 1024 * 1024   # v7x has 64 MiB/TC VMEM -> do not raise this
_BF = jnp.bfloat16


def _bf(x):
    return x.astype(_BF)


def _pick_tile(n, cap=512):
    """Largest row tile <= cap that divides n and is sublane (x8) aligned."""
    if n <= cap:
        return n
    for t in range(cap, 7, -1):
        if n % t == 0 and t % 8 == 0:
            return t
    # TODO(synk): pad-then-tile fallback for node counts with no x8 divisor.
    return n


# ----------------------------- activations ----------------------------------
def _apply_act(x, act):
    if act is None:
        return x
    if act == "tanh":
        return jnp.tanh(x)
    if act == "relu":
        return jnp.maximum(x, 0.0)
    if act == "leaky_relu":
        return jnp.where(x >= 0, x, 0.01 * x)
    raise ValueError(act)


# -------------- Pallas kernel: fused two-layer Linear chain ------------------
def _linear2_kernel(act1, act2, x_ref, w1_ref, b1_ref, w2_ref, b2_ref, o_ref):
    h = jax.lax.dot_general(_bf(x_ref[...]), _bf(w1_ref[...]),
                            (((1,), (0,)), ((), ())),
                            preferred_element_type=jnp.float32)
    h = _apply_act(h + b1_ref[...], act1)
    out = jax.lax.dot_general(_bf(h), _bf(w2_ref[...]), (((1,), (0,)), ((), ())),
                              preferred_element_type=jnp.float32)
    o_ref[...] = _apply_act(out + b2_ref[...], act2)


def linear2(x, p1, act1, p2, act2):
    """act2(act1(x@w1+b1)@w2+b2) in a single kernel (tiny dense chains)."""
    w1, b1 = p1
    w2, b2 = p2
    lead = x.shape[:-1]
    x2 = x.reshape(-1, x.shape[-1])
    cout = w2.shape[1]
    out = pl.pallas_call(
        functools.partial(_linear2_kernel, act1, act2),
        out_shape=jax.ShapeDtypeStruct((x2.shape[0], cout), jnp.float32),
    )(x2, w1, b1, w2, b2)
    return out.reshape(lead + (cout,))


# ---- Pallas kernel: DenseSAGEConv (+act,+BN) optionally fused with Linear ----
# out  = BN?( act( (A@X/clamp(deg,1))@Wrel + X@Wroot + b ) )
# out2 = BN2?( act2( out @ W2 + b2 ) )            (when a trailing Linear fuses)
def _sage_kernel(act, has_bn, has_lin2, act2, has_bn2, *refs):
    o_ref = refs[-1]
    it = iter(refs[:-1])
    xf_ref = next(it)
    adj_ref = next(it)
    wrel_ref = next(it)
    wroot_ref = next(it)
    b_ref = next(it)
    sc_ref = sh_ref = None
    if has_bn:
        sc_ref, sh_ref = next(it), next(it)
    w2_ref = b2_ref = sc2_ref = sh2_ref = None
    if has_lin2:
        w2_ref, b2_ref = next(it), next(it)
        if has_bn2:
            sc2_ref, sh2_ref = next(it), next(it)

    tn = adj_ref.shape[1]
    row0 = pl.multiple_of(pl.program_id(1) * tn, tn)

    xf = xf_ref[0]                                  # (N, Cin)  full nodes (resident)
    xt = xf_ref[0, pl.ds(row0, tn), :]              # (TN, Cin) this row tile (no 2nd DMA)
    adj = adj_ref[0]                                # (TN, N), bf16 from HBM

    # neighbor-mean aggregation (bf16 MXU op, f32 accumulation)
    agg = jax.lax.dot_general(_bf(adj), _bf(xf), (((1,), (0,)), ((), ())),
                              preferred_element_type=jnp.float32)
    deg = jnp.sum(adj.astype(jnp.float32), axis=-1, keepdims=True)
    agg = agg * pl.reciprocal(jnp.maximum(deg, 1.0), approx=True)

    # two dot_generals accumulated in f32 (no concat / lane shift)
    out = jax.lax.dot_general(_bf(agg), _bf(wrel_ref[...]), (((1,), (0,)), ((), ())),
                              preferred_element_type=jnp.float32)
    out = out + jax.lax.dot_general(_bf(xt), _bf(wroot_ref[...]),
                                    (((1,), (0,)), ((), ())),
                                    preferred_element_type=jnp.float32)
    out = _apply_act(out + b_ref[...], act)
    if has_bn:
        out = out * sc_ref[...] + sh_ref[...]
    if has_lin2:
        out = jax.lax.dot_general(_bf(out), _bf(w2_ref[...]), (((1,), (0,)), ((), ())),
                                  preferred_element_type=jnp.float32)
        out = _apply_act(out + b2_ref[...], act2)
        if has_bn2:
            out = out * sc2_ref[...] + sh2_ref[...]
    o_ref[0] = out


def sage_conv(x, adj, params, act=None, bn=None, lin2=None):
    """DenseSAGEConv + act + eval-BN, optionally fused with a trailing Linear.

    lin2 = (w2, b2, act2, bn2_or_None) applies act2(out@w2+b2) then BN2 to the
    resident tile (fuses sage22 / sage42 sites without an HBM round trip).
    """
    wrel, wroot, b = params
    B, N, cin = x.shape
    cmid = wrel.shape[1]
    tn = _pick_tile(N)
    has_bn = bn is not None
    has_lin2 = lin2 is not None

    in_specs = [
        pl.BlockSpec((1, N, cin), lambda b_, i: (b_, 0, 0)),    # full X (agg + root)
        pl.BlockSpec((1, tn, N), lambda b_, i: (b_, i, 0)),     # A row tile (bf16)
        pl.BlockSpec((cin, cmid), lambda b_, i: (0, 0)),
        pl.BlockSpec((cin, cmid), lambda b_, i: (0, 0)),
        pl.BlockSpec((1, cmid), lambda b_, i: (0, 0)),
    ]
    args = [x, adj, wrel, wroot, b]
    if has_bn:
        scale, shift = bn                                       # (N, 1) each
        in_specs += [pl.BlockSpec((tn, 1), lambda b_, i: (i, 0)),
                     pl.BlockSpec((tn, 1), lambda b_, i: (i, 0))]
        args += [scale, shift]
    act2 = None
    has_bn2 = False
    cout = cmid
    if has_lin2:
        w2, b2, act2, bn2 = lin2
        cout = w2.shape[1]
        in_specs += [pl.BlockSpec((cmid, cout), lambda b_, i: (0, 0)),
                     pl.BlockSpec((1, cout), lambda b_, i: (0, 0))]
        args += [w2, b2]
        if bn2 is not None:
            has_bn2 = True
            sc2, sh2 = bn2
            in_specs += [pl.BlockSpec((tn, 1), lambda b_, i: (i, 0)),
                         pl.BlockSpec((tn, 1), lambda b_, i: (i, 0))]
            args += [sc2, sh2]

    flops = 2 * B * N * N * cin + 4 * B * N * cin * cmid
    if has_lin2:
        flops += 2 * B * N * cmid * cout
    transc = B * N * cout if ("tanh" in (act, act2)) else 0
    bytes_acc = int(adj.dtype.itemsize) * B * N * N + 4 * (B * N * cin + B * N * cout)

    return pl.pallas_call(
        functools.partial(_sage_kernel, act, has_bn, has_lin2, act2, has_bn2),
        out_shape=jax.ShapeDtypeStruct((B, N, cout), jnp.float32),
        grid=(B, N // tn),
        in_specs=in_specs,
        out_specs=pl.BlockSpec((1, tn, cout), lambda b_, i: (b_, i, 0)),
        compiler_params=pltpu.CompilerParams(
            dimension_semantics=("parallel", "parallel"),
            vmem_limit_bytes=_VMEM_LIMIT),
        cost_estimate=pl.CostEstimate(flops=int(flops), transcendentals=int(transc),
                                      bytes_accessed=int(bytes_acc)),
    )(*args)


# ------------------- Pallas kernel: dense_mincut_pool ------------------------
# s <- softmax(s, -1); Xout = s^T X ; Aout = s^T A s, diag zeroed, sym-normalized.
# Tiled over the node axis: s^T X and s^T A accumulated across row tiles, the
# K x K finalization runs once on the last step (pl.when).
def _mincut_kernel(s_ref, x_ref, adj_ref, ox_ref, oa_ref, ssm_ref, tmp_ref):
    ni = pl.program_id(1)
    tn = s_ref.shape[1]

    @pl.when(ni == 0)
    def _():
        ox_ref[0] = jnp.zeros_like(ox_ref[0])
        tmp_ref[...] = jnp.zeros_like(tmp_ref)

    s = s_ref[0]                                               # (TN, K) logits, f32
    m = jnp.max(s, axis=-1, keepdims=True)
    e = jnp.exp(s - m)
    s = e * pl.reciprocal(jnp.sum(e, axis=-1, keepdims=True), approx=True)
    row0 = pl.multiple_of(ni * tn, tn)
    ssm_ref[pl.ds(row0, tn), :] = s                            # keep softmaxed tile

    s_bf = _bf(s)
    # accumulate s^T X in the resident output block, s^T A in VMEM scratch
    ox_ref[0] = ox_ref[0] + jax.lax.dot_general(
        s_bf, _bf(x_ref[0]), (((0,), (0,)), ((), ())),
        preferred_element_type=jnp.float32)                    # (K, C)
    tmp_ref[...] = tmp_ref[...] + jax.lax.dot_general(
        s_bf, adj_ref[0].astype(_BF), (((0,), (0,)), ((), ())),
        preferred_element_type=jnp.float32)                    # (K, N)

    @pl.when(ni == pl.num_programs(1) - 1)
    def _():
        oa = jax.lax.dot_general(_bf(tmp_ref[...]), _bf(ssm_ref[...]),
                                 (((1,), (0,)), ((), ())),
                                 preferred_element_type=jnp.float32)   # (K, K)
        k = oa.shape[0]
        ii = jax.lax.broadcasted_iota(jnp.int32, (k, k), 0)
        jj = jax.lax.broadcasted_iota(jnp.int32, (k, k), 1)
        oa = jnp.where(ii == jj, 0.0, oa)
        # same degree vector on both sides (torch_geometric parity);
        # (K,1)->(1,K) via mask+reduce (no small-transpose lowering).
        inv_r = pl.reciprocal(
            jnp.sqrt(jnp.sum(oa, axis=-1, keepdims=True)) + _EPS, approx=True)
        inv_c = jnp.sum(jnp.where(ii == jj, inv_r, 0.0), axis=0, keepdims=True)
        oa_ref[0] = (oa * inv_r * inv_c).astype(oa_ref.dtype)


def dense_mincut_pool(x, adj, s, a_dtype=jnp.bfloat16):
    B, N, C = x.shape
    K = s.shape[-1]
    tn = _pick_tile(N)
    flops = 2 * B * (N * K * C + N * N * K + K * N * K)
    transc = B * N * K + 2 * B * K
    bytes_acc = (int(adj.dtype.itemsize) * B * N * N
                 + 4 * B * (N * K + N * C + K * C)
                 + jnp.dtype(a_dtype).itemsize * B * K * K)
    return pl.pallas_call(
        _mincut_kernel,
        out_shape=(jax.ShapeDtypeStruct((B, K, C), jnp.float32),
                   jax.ShapeDtypeStruct((B, K, K), a_dtype)),
        grid=(B, N // tn),
        in_specs=[
            pl.BlockSpec((1, tn, K), lambda b_, i: (b_, i, 0)),
            pl.BlockSpec((1, tn, C), lambda b_, i: (b_, i, 0)),
            pl.BlockSpec((1, tn, N), lambda b_, i: (b_, i, 0)),
        ],
        out_specs=(pl.BlockSpec((1, K, C), lambda b_, i: (b_, 0, 0)),
                   pl.BlockSpec((1, K, K), lambda b_, i: (b_, 0, 0))),
        scratch_shapes=[pltpu.VMEM((N, K), jnp.float32),    # softmaxed S
                        pltpu.VMEM((K, N), jnp.float32)],   # s^T A accumulator
        compiler_params=pltpu.CompilerParams(
            dimension_semantics=("parallel", "arbitrary"),
            vmem_limit_bytes=_VMEM_LIMIT),
        cost_estimate=pl.CostEstimate(flops=int(flops), transcendentals=int(transc),
                                      bytes_accessed=int(bytes_acc)),
    )(s, x, adj)


# -------------- Pallas kernel: upsample fused with Linear(+act) --------------
# Xout = act((S @ X) @ W + b) ; Aout = S @ (S @ A)^T  (== S A^T S^T), tiled rows.
def _upsample_lin_kernel(act, sf_ref, x_ref, a_ref, w_ref, b_ref, ox_ref, oa_ref):
    tm = ox_ref.shape[1]
    row0 = pl.multiple_of(pl.program_id(1) * tm, tm)
    sf = _bf(sf_ref[0])                                 # (M, K) full S (resident)
    st = _bf(sf_ref[0, pl.ds(row0, tm), :])             # (TM, K) this row tile
    x = _bf(x_ref[0])                                   # (K, C)
    a = a_ref[0].astype(_BF)                            # (K, K)
    xo = jax.lax.dot_general(st, x, (((1,), (0,)), ((), ())),
                             preferred_element_type=jnp.float32)       # (TM, C)
    lin = jax.lax.dot_general(_bf(xo), _bf(w_ref[...]), (((1,), (0,)), ((), ())),
                              preferred_element_type=jnp.float32) + b_ref[...]
    ox_ref[0] = _apply_act(lin, act)
    # u = S_tile @ A^T ; Aout_tile = u @ S^T (both via RHS-transposed dot_general)
    u = jax.lax.dot_general(st, a, (((1,), (1,)), ((), ())),
                            preferred_element_type=jnp.float32)        # (TM, K)
    oa = jax.lax.dot_general(_bf(u), sf, (((1,), (1,)), ((), ())),
                             preferred_element_type=jnp.float32)       # (TM, M)
    oa_ref[0] = oa.astype(oa_ref.dtype)


def upsample_linear(x, adj, s, w, b, act="tanh", a_dtype=jnp.float32):
    B, M, K = s.shape
    C = x.shape[-1]
    cout = w.shape[1]
    tm = _pick_tile(M)
    flops = 2 * B * (M * K * C + M * C * cout + M * K * K + M * M * K)
    transc = B * M * cout if act == "tanh" else 0
    bytes_acc = (4 * B * (M * K + K * C + M * cout) + 4 * C * cout
                 + int(adj.dtype.itemsize) * B * K * K
                 + jnp.dtype(a_dtype).itemsize * B * M * M)
    return pl.pallas_call(
        functools.partial(_upsample_lin_kernel, act),
        out_shape=(jax.ShapeDtypeStruct((B, M, cout), jnp.float32),
                   jax.ShapeDtypeStruct((B, M, M), a_dtype)),
        grid=(B, M // tm),
        in_specs=[
            pl.BlockSpec((1, M, K), lambda b_, i: (b_, 0, 0)),    # S full (resident)
            pl.BlockSpec((1, K, C), lambda b_, i: (b_, 0, 0)),
            pl.BlockSpec((1, K, K), lambda b_, i: (b_, 0, 0)),
            pl.BlockSpec((C, cout), lambda b_, i: (0, 0)),
            pl.BlockSpec((1, cout), lambda b_, i: (0, 0)),
        ],
        out_specs=(pl.BlockSpec((1, tm, cout), lambda b_, i: (b_, i, 0)),
                   pl.BlockSpec((1, tm, M), lambda b_, i: (b_, i, 0))),
        compiler_params=pltpu.CompilerParams(
            dimension_semantics=("parallel", "parallel"),
            vmem_limit_bytes=_VMEM_LIMIT),
        cost_estimate=pl.CostEstimate(flops=int(flops), transcendentals=int(transc),
                                      bytes_accessed=int(bytes_acc)),
    )(s, x, adj, w, b)


# -------------------- BatchNorm1d (eval) -> fused scale/shift -----------------
def _bn_scale_shift(bn, eps=1e-5):
    # BatchNorm1d over (B, N, C) with num_features==N: per-node affine in eval.
    gamma, beta, mean, var = bn
    scale = gamma * jax.lax.rsqrt(var + eps)
    shift = beta - mean * scale
    return scale.reshape(-1, 1), shift.reshape(-1, 1)


# ------------------------- parameter initialization ---------------------------
def _init_linear(key, cin, cout):
    kw, kb = jax.random.split(key)
    bound = 1.0 / math.sqrt(cin)
    w = jax.random.uniform(kw, (cin, cout), jnp.float32, -bound, bound)
    b = jax.random.uniform(kb, (1, cout), jnp.float32, -bound, bound)
    return w, b


def _init_sage(key, cin, cout):
    k1, k2, k3 = jax.random.split(key, 3)
    bound = 1.0 / math.sqrt(cin)
    wrel = jax.random.uniform(k1, (cin, cout), jnp.float32, -bound, bound)
    wroot = jax.random.uniform(k2, (cin, cout), jnp.float32, -bound, bound)
    b = jax.random.uniform(k3, (1, cout), jnp.float32, -bound, bound)
    return wrel, wroot, b


def _init_bn(n):
    return (jnp.ones((n,), jnp.float32), jnp.zeros((n,), jnp.float32),
            jnp.zeros((n,), jnp.float32), jnp.ones((n,), jnp.float32))


def _xavier_uniform_3d(key, shape):
    # matches torch.nn.init.xavier_uniform on a (B, M, K) tensor
    fan_in = shape[1] * shape[2]
    fan_out = shape[0] * shape[2]
    bound = math.sqrt(6.0 / (fan_in + fan_out))
    return jax.random.uniform(key, shape, jnp.float32, -bound, bound)


def init_params(key, cfg):
    ks = jax.random.split(key, 16)
    p = {}
    p["sage1"] = _init_sage(ks[0], cfg["cin"], cfg["c1"])
    p["sage22"] = _init_linear(ks[1], cfg["c1"], cfg["c2"])
    p["poolit1"] = _init_sage(ks[2], cfg["c2"], cfg["k1"])
    p["sage3"] = _init_sage(ks[3], cfg["c2"], cfg["c3"])
    p["sage42"] = _init_linear(ks[4], cfg["c3"], cfg["c4"])
    p["poolit2"] = _init_sage(ks[5], cfg["c4"], cfg["k2"])
    p["sage5"] = _init_sage(ks[6], cfg["c4"], cfg["c5"])
    p["tr1"] = _init_linear(ks[7], cfg["c5"], cfg["c6"])
    p["tr2"] = _init_linear(ks[8], cfg["c6"], cfg["lat"])
    p["rev2"] = _init_linear(ks[9], cfg["lat"], cfg["c6"])
    p["rev1"] = _init_linear(ks[10], cfg["c6"], cfg["c5"])
    p["revsage5"] = _init_sage(ks[11], cfg["c5"], cfg["c4"])
    p["revsage42"] = _init_linear(ks[12], cfg["c4"], cfg["c3"])
    p["revsage3"] = _init_sage(ks[13], cfg["c3"], cfg["c2"])
    p["revsage22"] = _init_linear(ks[14], cfg["c2"], cfg["c1"])
    p["revsage1"] = _init_sage(ks[15], cfg["c1"], cfg["cin"])
    p["bano1"] = _init_bn(cfg["n"])   # shared by encode(h1) and decode(o3)
    p["bano2"] = _init_bn(cfg["n"])
    p["bano3"] = _init_bn(cfg["k1"])
    p["bano4"] = _init_bn(cfg["k1"])
    p["bano5"] = _init_bn(cfg["k2"])
    return p


# ------------------------------- forward --------------------------------------
def graph_ae_forward(params, cfg, x, adj, lengs, refMat, maxNodes, rng):
    del lengs, refMat  # unused by the PyTorch forward compute as well
    B = x.shape[0]

    # eval-mode BN folded into fused per-node scale/shift epilogues
    sc1, sh1 = _bn_scale_shift(params["bano1"])
    sc2, sh2 = _bn_scale_shift(params["bano2"])
    sc3, sh3 = _bn_scale_shift(params["bano3"])
    sc4, sh4 = _bn_scale_shift(params["bano4"])
    sc5, sh5 = _bn_scale_shift(params["bano5"])

    adj_bf = adj.astype(jnp.bfloat16)     # 0/1 adjacency: exact in bf16, half HBM

    # ---------------- encode ----------------
    # sage1(+tanh,+BN1) fused with sage22(+relu,+BN2); dropouts are identity (eval)
    h2 = sage_conv(x, adj_bf, params["sage1"], act="tanh", bn=(sc1, sh1),
                   lin2=(params["sage22"][0], params["sage22"][1], "relu",
                         (sc2, sh2)))
    pool1 = sage_conv(h2, adj_bf, params["poolit1"], act="relu")
    out1, adj1 = dense_mincut_pool(h2, adj_bf, pool1)                  # adj1 bf16
    # sage3(+relu,+BN3) fused with sage42(+tanh,+BN4)
    h4 = sage_conv(out1, adj1, params["sage3"], act="relu", bn=(sc3, sh3),
                   lin2=(params["sage42"][0], params["sage42"][1], "tanh",
                         (sc4, sh4)))
    pool2 = sage_conv(h4, adj1, params["poolit2"], act="leaky_relu")
    out2, adj2 = dense_mincut_pool(h4, adj1, pool2)                    # adj2 bf16
    out2 = sage_conv(out2, adj2, params["sage5"], act="tanh", bn=(sc5, sh5))
    mu = linear2(out2, params["tr1"], "relu", params["tr2"], None)     # tr1->tr2
    logvar = mu   # module returns self.tr2(hidden5) twice -> identical tensors

    # ------------- reparametrize -------------
    k_eps, k_s, k_s2 = jax.random.split(rng, 3)
    eps = jax.random.normal(k_eps, mu.shape, jnp.float32)
    z = mu + eps * jnp.exp(0.5 * logvar)

    # ---------------- decode ----------------
    o1 = linear2(z, params["rev2"], "tanh", params["rev1"], "tanh")    # rev2->rev1
    o1 = sage_conv(o1, adj2, params["revsage5"], act="tanh")
    s = _xavier_uniform_3d(k_s, (B, cfg["k1"], o1.shape[1]))           # (B, K1, K2)
    o2, aout2 = upsample_linear(o1, adj2, s, *params["revsage42"], act="tanh",
                                a_dtype=jnp.bfloat16)                  # aout2 bf16
    o2 = sage_conv(o2, aout2, params["revsage3"], act="tanh")
    s2 = _xavier_uniform_3d(k_s2, (B, maxNodes, o2.shape[1]))          # (B, maxN, K1)
    o3, aout3 = upsample_linear(o2, aout2, s2, *params["revsage22"], act="tanh",
                                a_dtype=jnp.float32)                   # returned: f32
    o3 = sage_conv(o3, aout3, params["revsage1"], act="tanh", bn=(sc1, sh1))
    return o3, aout3, mu, logvar


# --------------------------------- main ----------------------------------------
if __name__ == "__main__":
    # Small shapes (original module hard-codes N=1000, pool1=400, pool2=200,
    # latent=64; here scaled to N=128, pool1=32, pool2=16, latent=64 while
    # keeping the identical dataflow).
    cfg = dict(cin=8, c1=32, c2=32, c3=32, c4=32, c5=32, c6=32,
               lat=64, k1=32, k2=16, n=128)
    B = 2
    N = cfg["n"]
    maxNodes = N   # bano1 is shared by encode (N nodes) and decode (maxNodes nodes)
    assert maxNodes == cfg["n"], "bano1 sharing requires maxNodes == n (as in torch)"

    key = jax.random.PRNGKey(0)
    kp, kx, ka, krng = jax.random.split(key, 4)
    params = init_params(kp, cfg)

    x = jax.random.normal(kx, (B, N, cfg["cin"]), jnp.float32)
    a = (jax.random.uniform(ka, (B, N, N)) < 0.1).astype(jnp.float32)
    adj = jnp.maximum(a, jnp.transpose(a, (0, 2, 1)))   # symmetric 0/1 adjacency
    lengs = jnp.full((B,), N, jnp.int32)                # not used in compute
    refMat = jnp.zeros((B, N), jnp.float32)             # not used in compute

    z2, adj_out, mu, logvar = graph_ae_forward(
        params, cfg, x, adj, lengs, refMat, maxNodes, krng)
    jax.block_until_ready((z2, adj_out, mu, logvar))

    assert z2.shape == (B, maxNodes, cfg["cin"])
    assert adj_out.shape == (B, maxNodes, maxNodes)
    assert mu.shape == (B, cfg["k2"], cfg["lat"]) and logvar.shape == mu.shape
    assert bool(jnp.isfinite(z2).all()) and bool(jnp.isfinite(adj_out).all())
    print("KERNEL_OK")
</pallas_src>

<mosaic_0001>
module attributes {stable_mosaic.version = 11 : i64} {
  func.func @_sage_kernel(%arg0: i32, %arg1: i32, %arg2: memref<1x128x8xf32, #tpu.memory_space<vmem>>, %arg3: memref<1x128x128xbf16, #tpu.memory_space<vmem>>, %arg4: memref<8x32xf32, #tpu.memory_space<vmem>>, %arg5: memref<8x32xf32, #tpu.memory_space<vmem>>, %arg6: memref<1x32xf32, #tpu.memory_space<vmem>>, %arg7: memref<128x1xf32, #tpu.memory_space<vmem>>, %arg8: memref<128x1xf32, #tpu.memory_space<vmem>>, %arg9: memref<32x32xf32, #tpu.memory_space<vmem>>, %arg10: memref<1x32xf32, #tpu.memory_space<vmem>>, %arg11: memref<128x1xf32, #tpu.memory_space<vmem>>, %arg12: memref<128x1xf32, #tpu.memory_space<vmem>>, %arg13: memref<1x128x32xf32, #tpu.memory_space<vmem>>) attributes {dimension_semantics = [#tpu.dimension_semantics<parallel>, #tpu.dimension_semantics<parallel>], iteration_bounds = array<i64: 2, 1>, scalar_prefetch = 0 : i64, scratch_operands = 0 : i64, tpu.core_type = #tpu.core_type<tc>, window_params = [{transform_indices = @transform_0, window_bounds = array<i64: 1, 128, 8>}, {transform_indices = @transform_1, window_bounds = array<i64: 1, 128, 128>}, {pipeline_mode = #tpu.pipeline_mode<synchronous>, transform_indices = @transform_2, window_bounds = array<i64: 8, 32>}, {pipeline_mode = #tpu.pipeline_mode<synchronous>, transform_indices = @transform_3, window_bounds = array<i64: 8, 32>}, {pipeline_mode = #tpu.pipeline_mode<synchronous>, transform_indices = @transform_4, window_bounds = array<i64: 1, 32>}, {transform_indices = @transform_5, window_bounds = array<i64: 128, 1>}, {transform_indices = @transform_6, window_bounds = array<i64: 128, 1>}, {pipeline_mode = #tpu.pipeline_mode<synchronous>, transform_indices = @transform_7, window_bounds = array<i64: 32, 32>}, {pipeline_mode = #tpu.pipeline_mode<synchronous>, transform_indices = @transform_8, window_bounds = array<i64: 1, 32>}, {transform_indices = @transform_9, window_bounds = array<i64: 128, 1>}, {transform_indices = @transform_10, window_bounds = array<i64: 128, 1>}, {transform_indices = @transform_11, window_bounds = array<i64: 1, 128, 32>}]} {
    %c128_i32 = arith.constant 128 : i32
    %0 = arith.muli %arg1, %c128_i32 : i32
    %1 = tpu.assume_multiple %0, 128 : i32
    %c0 = arith.constant 0 : index
    %c0_0 = arith.constant 0 : index
    %c0_1 = arith.constant 0 : index
    %2 = vector.load %arg2[%c0, %c0_0, %c0_1] : memref<1x128x8xf32, #tpu.memory_space<vmem>>, vector<1x128x8xf32>
    %3 = vector.shape_cast %2 : vector<1x128x8xf32> to vector<128x8xf32>
    %c0_2 = arith.constant 0 : index
    %4 = arith.index_cast %1 : i32 to index
    %c0_3 = arith.constant 0 : index
    %5 = vector.load %arg2[%c0_2, %4, %c0_3] : memref<1x128x8xf32, #tpu.memory_space<vmem>>, vector<1x128x8xf32>
    %6 = vector.shape_cast %5 : vector<1x128x8xf32> to vector<128x8xf32>
    %c0_4 = arith.constant 0 : index
    %c0_5 = arith.constant 0 : index
    %c0_6 = arith.constant 0 : index
    %7 = vector.load %arg3[%c0_4, %c0_5, %c0_6] : memref<1x128x128xbf16, #tpu.memory_space<vmem>>, vector<1x128x128xbf16>
    %8 = vector.shape_cast %7 : vector<1x128x128xbf16> to vector<128x128xbf16>
    %9 = arith.truncf %3 : vector<128x8xf32> to vector<128x8xbf16>
    %cst = arith.constant dense<0.000000e+00> : vector<128x8xf32>
    %10 = tpu.matmul %8, %9, %cst {dimension_numbers = #tpu.dot_dimension_numbers<[1], [0], [0], [1], [0, 0, 1, 1], [], []>} : vector<128x128xbf16>, vector<128x8xbf16>, vector<128x8xf32> -> vector<128x8xf32>
    %11 = arith.extf %8 : vector<128x128xbf16> to vector<128x128xf32>
    %cst_7 = arith.constant dense<0.000000e+00> : vector<128xf32>
    %12 = vector.multi_reduction <add>, %11, %cst_7 [1] : vector<128x128xf32> to vector<128xf32>
    %13 = vector.shape_cast %12 : vector<128xf32> to vector<128x1xf32>
    %cst_8 = arith.constant 1.000000e+00 : f32
    %14 = vector.broadcast %cst_8 : f32 to vector<128x1xf32>
    %15 = arith.maximumf %13, %14 : vector<128x1xf32>
    %16 = tpu.reciprocal %15 {approx = true} : vector<128x1xf32> -> vector<128x1xf32>
    %17 = vector.broadcast %16 : vector<128x1xf32> to vector<128x8xf32>
    %18 = arith.mulf %10, %17 : vector<128x8xf32>
    %19 = arith.truncf %18 : vector<128x8xf32> to vector<128x8xbf16>
    %c0_9 = arith.constant 0 : index
    %c0_10 = arith.constant 0 : index
    %20 = vector.load %arg4[%c0_9, %c0_10] : memref<8x32xf32, #tpu.memory_space<vmem>>, vector<8x32xf32>
    %21 = arith.truncf %20 : vector<8x32xf32> to vector<8x32xbf16>
    %cst_11 = arith.constant dense<0.000000e+00> : vector<128x32xf32>
    %22 = tpu.matmul %19, %21, %cst_11 {dimension_numbers = #tpu.dot_dimension_numbers<[1], [0], [0], [1], [0, 0, 1, 1], [], []>} : vector<128x8xbf16>, vector<8x32xbf16>, vector<128x32xf32> -> vector<128x32xf32>
    %23 = arith.truncf %6 : vector<128x8xf32> to vector<128x8xbf16>
    %c0_12 = arith.constant 0 : index
    %c0_13 = arith.constant 0 : index
    %24 = vector.load %arg5[%c0_12, %c0_13] : memref<8x32xf32, #tpu.memory_space<vmem>>, vector<8x32xf32>
    %25 = arith.truncf %24 : vector<8x32xf32> to vector<8x32xbf16>
    %cst_14 = arith.constant dense<0.000000e+00> : vector<128x32xf32>
    %26 = tpu.matmul %23, %25, %cst_14 {dimension_numbers = #tpu.dot_dimension_numbers<[1], [0], [0], [1], [0, 0, 1, 1], [], []>} : vector<128x8xbf16>, vector<8x32xbf16>, vector<128x32xf32> -> vector<128x32xf32>
    %27 = arith.addf %22, %26 : vector<128x32xf32>
    %c0_15 = arith.constant 0 : index
    %c0_16 = arith.constant 0 : index
    %28 = vector.load %arg6[%c0_15, %c0_16] : memref<1x32xf32, #tpu.memory_space<vmem>>, vector<1x32xf32>
    %29 = vector.broadcast %28 : vector<1x32xf32> to vector<128x32xf32>
    %30 = arith.addf %27, %29 : vector<128x32xf32>
    %31 = math.tanh %30 : vector<128x32xf32>
    %c0_17 = arith.constant 0 : index
    %c0_18 = arith.constant 0 : index
    %32 = vector.load %arg7[%c0_17, %c0_18] : memref<128x1xf32, #tpu.memory_space<vmem>>, vector<128x1xf32>
    %33 = vector.broadcast %32 : vector<128x1xf32> to vector<128x32xf32>
    %34 = arith.mulf %31, %33 : vector<128x32xf32>
    %c0_19 = arith.constant 0 : index
    %c0_20 = arith.constant 0 : index
    %35 = vector.load %arg8[%c0_19, %c0_20] : memref<128x1xf32, #tpu.memory_space<vmem>>, vector<128x1xf32>
    %36 = vector.broadcast %35 : vector<128x1xf32> to vector<128x32xf32>
    %37 = arith.addf %34, %36 : vector<128x32xf32>
    %38 = arith.truncf %37 : vector<128x32xf32> to vector<128x32xbf16>
    %c0_21 = arith.constant 0 : index
    %c0_22 = arith.constant 0 : index
    %39 = vector.load %arg9[%c0_21, %c0_22] : memref<32x32xf32, #tpu.memory_space<vmem>>, vector<32x32xf32>
    %40 = arith.truncf %39 : vector<32x32xf32> to vector<32x32xbf16>
    %cst_23 = arith.constant dense<0.000000e+00> : vector<128x32xf32>
    %41 = tpu.matmul %38, %40, %cst_23 {dimension_numbers = #tpu.dot_dimension_numbers<[1], [0], [0], [1], [0, 0, 1, 1], [], []>} : vector<128x32xbf16>, vector<32x32xbf16>, vector<128x32xf32> -> vector<128x32xf32>
    %c0_24 = arith.constant 0 : index
    %c0_25 = arith.constant 0 : index
    %42 = vector.load %arg10[%c0_24, %c0_25] : memref<1x32xf32, #tpu.memory_space<vmem>>, vector<1x32xf32>
    %43 = vector.broadcast %42 : vector<1x32xf32> to vector<128x32xf32>
    %44 = arith.addf %41, %43 : vector<128x32xf32>
    %cst_26 = arith.constant 0.000000e+00 : f32
    %45 = vector.broadcast %cst_26 : f32 to vector<128x32xf32>
    %46 = arith.maximumf %44, %45 : vector<128x32xf32>
    %c0_27 = arith.constant 0 : index
    %c0_28 = arith.constant 0 : index
    %47 = vector.load %arg11[%c0_27, %c0_28] : memref<128x1xf32, #tpu.memory_space<vmem>>, vector<128x1xf32>
    %48 = vector.broadcast %47 : vector<128x1xf32> to vector<128x32xf32>
    %49 = arith.mulf %46, %48 : vector<128x32xf32>
    %c0_29 = arith.constant 0 : index
    %c0_30 = arith.constant 0 : index
    %50 = vector.load %arg12[%c0_29, %c0_30] : memref<128x1xf32, #tpu.memory_space<vmem>>, vector<128x1xf32>
    %51 = vector.broadcast %50 : vector<128x1xf32> to vector<128x32xf32>
    %52 = arith.addf %49, %51 : vector<128x32xf32>
    %c0_31 = arith.constant 0 : index
    %c0_32 = arith.constant 0 : index
    %c0_33 = arith.constant 0 : index
    %53 = vector.load %arg13[%c0_31, %c0_32, %c0_33] : memref<1x128x32xf32, #tpu.memory_space<vmem>>, vector<1x128x32xf32>
    %54 = vector.shape_cast %53 : vector<1x128x32xf32> to vector<128x32xf32>
    %55 = vector.shape_cast %52 : vector<128x32xf32> to vector<1x128x32xf32>
    tpu.vector_store %arg13[%c0_31, %c0_32, %c0_33], %55 {strides = array<i32>} : memref<1x128x32xf32, #tpu.memory_space<vmem>>, vector<1x128x32xf32>,
    return
  }
  func.func @transform_0(%arg0: i32, %arg1: i32) -> (i32, i32, i32) {
    %c0_i32 = arith.constant 0 : i32
    %c0_i32_0 = arith.constant 0 : i32
    %c0_i32_1 = arith.constant 0 : i32
    return %arg0, %c0_i32, %c0_i32_0 : i32, i32, i32
  }
  func.func @transform_1(%arg0: i32, %arg1: i32) -> (i32, i32, i32) {
    %c0_i32 = arith.constant 0 : i32
    %c0_i32_0 = arith.constant 0 : i32
    return %arg0, %arg1, %c0_i32 : i32, i32, i32
  }
  func.func @transform_2(%arg0: i32, %arg1: i32) -> (i32, i32) {
    %c0_i32 = arith.constant 0 : i32
    %c0_i32_0 = arith.constant 0 : i32
    %c0_i32_1 = arith.constant 0 : i32
    return %c0_i32, %c0_i32_0 : i32, i32
  }
  func.func @transform_3(%arg0: i32, %arg1: i32) -> (i32, i32) {
    %c0_i32 = arith.constant 0 : i32
    %c0_i32_0 = arith.constant 0 : i32
    %c0_i32_1 = arith.constant 0 : i32
    return %c0_i32, %c0_i32_0 : i32, i32
  }
  func.func @transform_4(%arg0: i32, %arg1: i32) -> (i32, i32) {
    %c0_i32 = arith.constant 0 : i32
    %c0_i32_0 = arith.constant 0 : i32
    %c0_i32_1 = arith.constant 0 : i32
    return %c0_i32, %c0_i32_0 : i32, i32
  }
  func.func @transform_5(%arg0: i32, %arg1: i32) -> (i32, i32) {
    %c0_i32 = arith.constant 0 : i32
    %c0_i32_0 = arith.constant 0 : i32
    return %arg1, %c0_i32 : i32, i32
  }
  func.func @transform_6(%arg0: i32, %arg1: i32) -> (i32, i32) {
    %c0_i32 = arith.constant 0 : i32
    %c0_i32_0 = arith.constant 0 : i32
    return %arg1, %c0_i32 : i32, i32
  }
  func.func @transform_7(%arg0: i32, %arg1: i32) -> (i32, i32) {
    %c0_i32 = arith.constant 0 : i32
    %c0_i32_0 = arith.constant 0 : i32
    %c0_i32_1 = arith.constant 0 : i32
    return %c0_i32, %c0_i32_0 : i32, i32
  }
  func.func @transform_8(%arg0: i32, %arg1: i32) -> (i32, i32) {
    %c0_i32 = arith.constant 0 : i32
    %c0_i32_0 = arith.constant 0 : i32
    %c0_i32_1 = arith.constant 0 : i32
    return %c0_i32, %c0_i32_0 : i32, i32
  }
  func.func @transform_9(%arg0: i32, %arg1: i32) -> (i32, i32) {
    %c0_i32 = arith.constant 0 : i32
    %c0_i32_0 = arith.constant 0 : i32
    return %arg1, %c0_i32 : i32, i32
  }
  func.func @transform_10(%arg0: i32, %arg1: i32) -> (i32, i32) {
    %c0_i32 = arith.constant 0 : i32
    %c0_i32_0 = arith.constant 0 : i32
    return %arg1, %c0_i32 : i32, i32
  }
  func.func @transform_11(%arg0: i32, %arg1: i32) -> (i32, i32, i32) {
    %c0_i32 = arith.constant 0 : i32
    %c0_i32_0 = arith.constant 0 : i32
    return %arg0, %arg1, %c0_i32 : i32, i32, i32
  }
}

</mosaic_0001>

<llo_original>
// kernel: tpu_custom_call.1
$region0: #{tpu_custom_call.1}
  #allocation0 [shape = 'u32[]', space=smem, size = 0x4, offset = 0x4, fixed_abs, tag = 'smem constant byte address 0x4 - core index']
  #allocation1 [shape = 'u32[72,128]{1,0:T(1,128)}', space=vmem, size = 0x9000, scoped, tag = 'internal scratch']
  %s0 = inlined_call_operand.vmem [shape: f32[2,128,8], index: 0, kind: input, shape index: {}]
  %s1 = inlined_call_operand.vmem [shape: bf16[2,128,128], index: 1, kind: input, shape index: {}]
  %s2 = inlined_call_operand.vmem [shape: f32[8,32], index: 2, kind: input, shape index: {}]
  %s3 = inlined_call_operand.vmem [shape: f32[8,32], index: 3, kind: input, shape index: {}]
  %s4 = inlined_call_operand.vmem [shape: f32[1,32], index: 4, kind: input, shape index: {}]
  %s5 = inlined_call_operand.vmem [shape: f32[128,1], index: 5, kind: input, shape index: {}]
  %s6 = inlined_call_operand.vmem [shape: f32[128,1], index: 6, kind: input, shape index: {}]
  %s7 = inlined_call_operand.vmem [shape: f32[32,32], index: 7, kind: input, shape index: {}]
  %s8 = inlined_call_operand.vmem [shape: f32[1,32], index: 8, kind: input, shape index: {}]
  %s9 = inlined_call_operand.vmem [shape: f32[128,1], index: 9, kind: input, shape index: {}]
  %s10 = inlined_call_operand.vmem [shape: f32[128,1], index: 10, kind: input, shape index: {}]
  %s11 = inlined_call_operand.vmem [shape: f32[2,128,32], index: 11, kind: output, shape index: {}]
  %s12 = sld [smem:[#allocation0]]
  $region77: #{tpu_custom_call.1} parent=0
    _
  %s14 = ssub.s32 1, %s12
  %s15 = scalar_select 0, %s14, %s12
  loop: start=0, step=1, limit=4
  $region2: #{tpu_custom_call.1} parent=0 // loop_pre_header
    _
  $region3: #{tpu_custom_call.1} parent=0 // loop_header
    %s17 = sphi 0, %s21
    %p18 = scmp.ge.s32.totalorder %s17, 4
    %s24 = sphi 0, %s36
    %s25 = sphi 0, %s32
    %s26 = sphi 0, %s24
    %s27 = sphi 0, %s25
    %s28 = sphi 0, %s26
    %s29 = sphi 0, %s27
    %s39 = sphi 0, %s41
    %s42 = sphi 0, %s39
    %s43 = sphi 0, %s42
    %s59 = sphi 0, %s43
    %s67 = sphi 0, %s69
    %s70 = sphi 0, %s67
    %s71 = sphi 0, %s70
    %s87 = sphi 0, %s71
    %s91 = sphi 0, %s91
    %s93 = sphi 0, %s91
    %s94 = sphi 0, %s93
    %s108 = sphi 0, %s94
    %s112 = sphi 0, %s112
    %s114 = sphi 0, %s112
    %s115 = sphi 0, %s114
    %s129 = sphi 0, %s115
    %s133 = sphi 0, %s133
    %s135 = sphi 0, %s133
    %s136 = sphi 0, %s135
    %s150 = sphi 0, %s136
    %s156 = sphi 0, %s158
    %s159 = sphi 0, %s156
    %s160 = sphi 0, %s159
    %s176 = sphi 0, %s160
    %s182 = sphi 0, %s184
    %s185 = sphi 0, %s182
    %s186 = sphi 0, %s185
    %s202 = sphi 0, %s186
    %s206 = sphi 0, %s206
    %s208 = sphi 0, %s206
    %s209 = sphi 0, %s208
    %s223 = sphi 0, %s209
    %s227 = sphi 0, %s227
    %s229 = sphi 0, %s227
    %s230 = sphi 0, %s229
    %s244 = sphi 0, %s230
    %s250 = sphi 0, %s252
    %s253 = sphi 0, %s250
    %s254 = sphi 0, %s253
    %s270 = sphi 0, %s254
    %s276 = sphi 0, %s278
    %s279 = sphi 0, %s276
    %s280 = sphi 0, %s279
    %s296 = sphi 0, %s280
    %s304 = sphi 0, %s306
    %s307 = sphi 0, %s304
    %s308 = sphi 0, %s307
    %s324 = sphi 0, %s308
  $region4: #{tpu_custom_call.1} parent=0 // loop_header_branch
    %20 = sbr.rel (%p18) target = $region8
  $region5: #{tpu_custom_call.1} parent=0 // loop_body
    %s22 = ssub.s32 %s17, 1
    %s23 = ssub.s32 %s17, 2
    %s30 = sadd.s32 1, %s25
    %p31 = scmp.ge.s32.totalorder %s30, 1
    %s32 = scalar_select %p31, 0, %s30
    %s33 = sadd.s32 1, %s24
    %s34 = scalar_select %p31, %s33, %s24
    %p35 = scmp.ge.s32.totalorder %s34, 2
    %s36 = scalar_select %p35, 0, %s34
    %s37 = ssub.s32 %s24, %s36
    %p38 = scmp.eq.s32.totalorder %s37, 0
    %s40 = sadd.s32 %s39, 1
    %s41 = scalar_select %p38, %s39, %s40
    %p44 = pneg %p38
    %p45 = scmp.eq.s32.totalorder %s17, 1
    %p46 = por %p44, %p45
    %p47 = scmp.ne.s32.totalorder %s39, %s42
    %p48 = scmp.eq.s32.totalorder %s17, 0
    %p49 = por %p47, %p48
    %p50 = scmp.ne.s32.totalorder %s39, %s42
    %p51 = scmp.eq.s32.totalorder %s22, 1
    %p52 = por %p50, %p51
    %p53 = scmp.ne.s32.totalorder %s42, %s43
    %p54 = scmp.eq.s32.totalorder %s22, 0
    %p55 = por %p53, %p54
    %p56 = scmp.ne.s32.totalorder %s42, %s43
    %p57 = scmp.eq.s32.totalorder %s23, 1
    %p58 = por %p56, %p57
    %p60 = scmp.ne.s32.totalorder %s43, %s59
    %p61 = scmp.eq.s32.totalorder %s23, 0
    %p62 = por %p60, %p61
    %s63 = ssub.s32 %s24, %s36
    %s64 = ssub.s32 %s25, %s32
    %s65 = sor.u32 %s63, %s64
    %p66 = scmp.eq.s32.totalorder %s65, 0
    %s68 = sadd.s32 %s67, 1
    %s69 = scalar_select %p66, %s67, %s68
    %p72 = pneg %p66
    %p73 = scmp.eq.s32.totalorder %s17, 1
    %p74 = por %p72, %p73
    %p75 = scmp.ne.s32.totalorder %s67, %s70
    %p76 = scmp.eq.s32.totalorder %s17, 0
    %p77 = por %p75, %p76
    %p78 = scmp.ne.s32.totalorder %s67, %s70
    %p79 = scmp.eq.s32.totalorder %s22, 1
    %p80 = por %p78, %p79
    %p81 = scmp.ne.s32.totalorder %s70, %s71
    %p82 = scmp.eq.s32.totalorder %s22, 0
    %p83 = por %p81, %p82
    %p84 = scmp.ne.s32.totalorder %s70, %s71
    %p85 = scmp.eq.s32.totalorder %s23, 1
    %p86 = por %p84, %p85
    %p88 = scmp.ne.s32.totalorder %s71, %s87
    %p89 = scmp.eq.s32.totalorder %s23, 0
    %p90 = por %p88, %p89
    %s92 = sadd.s32 %s91, 1
    %p95 = scmp.eq.s32.totalorder %s17, 1
    %p96 = scmp.ne.s32.totalorder %s91, %s93
    %p97 = scmp.eq.s32.totalorder %s17, 0
    %p98 = por %p96, %p97
    %p99 = scmp.ne.s32.totalorder %s91, %s93
    %p100 = scmp.eq.s32.totalorder %s22, 1
    %p101 = por %p99, %p100
    %p102 = scmp.ne.s32.totalorder %s93, %s94
    %p103 = scmp.eq.s32.totalorder %s22, 0
    %p104 = por %p102, %p103
    %p105 = scmp.ne.s32.totalorder %s93, %s94
    %p106 = scmp.eq.s32.totalorder %s23, 1
    %p107 = por %p105, %p106
    %p109 = scmp.ne.s32.totalorder %s94, %s108
    %p110 = scmp.eq.s32.totalorder %s23, 0
    %p111 = por %p109, %p110
    %s113 = sadd.s32 %s112, 1
    %p116 = scmp.eq.s32.totalorder %s17, 1
    %p117 = scmp.ne.s32.totalorder %s112, %s114
    %p118 = scmp.eq.s32.totalorder %s17, 0
    %p119 = por %p117, %p118
    %p120 = scmp.ne.s32.totalorder %s112, %s114
    %p121 = scmp.eq.s32.totalorder %s22, 1
    %p122 = por %p120, %p121
    %p123 = scmp.ne.s32.totalorder %s114, %s115
    %p124 = scmp.eq.s32.totalorder %s22, 0
    %p125 = por %p123, %p124
    %p126 = scmp.ne.s32.totalorder %s114, %s115
    %p127 = scmp.eq.s32.totalorder %s23, 1
    %p128 = por %p126, %p127
    %p130 = scmp.ne.s32.totalorder %s115, %s129
    %p131 = scmp.eq.s32.totalorder %s23, 0
    %p132 = por %p130, %p131
    %s134 = sadd.s32 %s133, 1
    %p137 = scmp.eq.s32.totalorder %s17, 1
    %p138 = scmp.ne.s32.totalorder %s133, %s135
    %p139 = scmp.eq.s32.totalorder %s17, 0
    %p140 = por %p138, %p139
    %p141 = scmp.ne.s32.totalorder %s133, %s135
    %p142 = scmp.eq.s32.totalorder %s22, 1
    %p143 = por %p141, %p142
    %p144 = scmp.ne.s32.totalorder %s135, %s136
    %p145 = scmp.eq.s32.totalorder %s22, 0
    %p146 = por %p144, %p145
    %p147 = scmp.ne.s32.totalorder %s135, %s136
    %p148 = scmp.eq.s32.totalorder %s23, 1
    %p149 = por %p147, %p148
    %p151 = scmp.ne.s32.totalorder %s136, %s150
    %p152 = scmp.eq.s32.totalorder %s23, 0
    %p153 = por %p151, %p152
    %s154 = ssub.s32 %s25, %s32
    %p155 = scmp.eq.s32.totalorder %s154, 0
    %s157 = sadd.s32 %s156, 1
    %s158 = scalar_select %p155, %s156, %s157
    %p161 = pneg %p155
    %p162 = scmp.eq.s32.totalorder %s17, 1
    %p163 = por %p161, %p162
    %p164 = scmp.ne.s32.totalorder %s156, %s159
    %p165 = scmp.eq.s32.totalorder %s17, 0
    %p166 = por %p164, %p165
    %p167 = scmp.ne.s32.totalorder %s156, %s159
    %p168 = scmp.eq.s32.totalorder %s22, 1
    %p169 = por %p167, %p168
    %p170 = scmp.ne.s32.totalorder %s159, %s160
    %p171 = scmp.eq.s32.totalorder %s22, 0
    %p172 = por %p170, %p171
    %p173 = scmp.ne.s32.totalorder %s159, %s160
    %p174 = scmp.eq.s32.totalorder %s23, 1
    %p175 = por %p173, %p174
    %p177 = scmp.ne.s32.totalorder %s160, %s176
    %p178 = scmp.eq.s32.totalorder %s23, 0
    %p179 = por %p177, %p178
    %s180 = ssub.s32 %s25, %s32
    %p181 = scmp.eq.s32.totalorder %s180, 0
    %s183 = sadd.s32 %s182, 1
    %s184 = scalar_select %p181, %s182, %s183
    %p187 = pneg %p181
    %p188 = scmp.eq.s32.totalorder %s17, 1
    %p189 = por %p187, %p188
    %p190 = scmp.ne.s32.totalorder %s182, %s185
    %p191 = scmp.eq.s32.totalorder %s17, 0
    %p192 = por %p190, %p191
    %p193 = scmp.ne.s32.totalorder %s182, %s185
    %p194 = scmp.eq.s32.totalorder %s22, 1
    %p195 = por %p193, %p194
    %p196 = scmp.ne.s32.totalorder %s185, %s186
    %p197 = scmp.eq.s32.totalorder %s22, 0
    %p198 = por %p196, %p197
    %p199 = scmp.ne.s32.totalorder %s185, %s186
    %p200 = scmp.eq.s32.totalorder %s23, 1
    %p201 = por %p199, %p200
    %p203 = scmp.ne.s32.totalorder %s186, %s202
    %p204 = scmp.eq.s32.totalorder %s23, 0
    %p205 = por %p203, %p204
    %s207 = sadd.s32 %s206, 1
    %p210 = scmp.eq.s32.totalorder %s17, 1
    %p211 = scmp.ne.s32.totalorder %s206, %s208
    %p212 = scmp.eq.s32.totalorder %s17, 0
    %p213 = por %p211, %p212
    %p214 = scmp.ne.s32.totalorder %s206, %s208
    %p215 = scmp.eq.s32.totalorder %s22, 1
    %p216 = por %p214, %p215
    %p217 = scmp.ne.s32.totalorder %s208, %s209
    %p218 = scmp.eq.s32.totalorder %s22, 0
    %p219 = por %p217, %p218
    %p220 = scmp.ne.s32.totalorder %s208, %s209
    %p221 = scmp.eq.s32.totalorder %s23, 1
    %p222 = por %p220, %p221
    %p224 = scmp.ne.s32.totalorder %s209, %s223
    %p225 = scmp.eq.s32.totalorder %s23, 0
    %p226 = por %p224, %p225
    %s228 = sadd.s32 %s227, 1
    %p231 = scmp.eq.s32.totalorder %s17, 1
    %p232 = scmp.ne.s32.totalorder %s227, %s229
    %p233 = scmp.eq.s32.totalorder %s17, 0
    %p234 = por %p232, %p233
    %p235 = scmp.ne.s32.totalorder %s227, %s229
    %p236 = scmp.eq.s32.totalorder %s22, 1
    %p237 = por %p235, %p236
    %p238 = scmp.ne.s32.totalorder %s229, %s230
    %p239 = scmp.eq.s32.totalorder %s22, 0
    %p240 = por %p238, %p239
    %p241 = scmp.ne.s32.totalorder %s229, %s230
    %p242 = scmp.eq.s32.totalorder %s23, 1
    %p243 = por %p241, %p242
    %p245 = scmp.ne.s32.totalorder %s230, %s244
    %p246 = scmp.eq.s32.totalorder %s23, 0
    %p247 = por %p245, %p246
    %s248 = ssub.s32 %s25, %s32
    %p249 = scmp.eq.s32.totalorder %s248, 0
    %s251 = sadd.s32 %s250, 1
    %s252 = scalar_select %p249, %s250, %s251
    %p255 = pneg %p249
    %p256 = scmp.eq.s32.totalorder %s17, 1
    %p257 = por %p255, %p256
    %p258 = scmp.ne.s32.totalorder %s250, %s253
    %p259 = scmp.eq.s32.totalorder %s17, 0
    %p260 = por %p258, %p259
    %p261 = scmp.ne.s32.totalorder %s250, %s253
    %p262 = scmp.eq.s32.totalorder %s22, 1
    %p263 = por %p261, %p262
    %p264 = scmp.ne.s32.totalorder %s253, %s254
    %p265 = scmp.eq.s32.totalorder %s22, 0
    %p266 = por %p264, %p265
    %p267 = scmp.ne.s32.totalorder %s253, %s254
    %p268 = scmp.eq.s32.totalorder %s23, 1
    %p269 = por %p267, %p268
    %p271 = scmp.ne.s32.totalorder %s254, %s270
    %p272 = scmp.eq.s32.totalorder %s23, 0
    %p273 = por %p271, %p272
    %s274 = ssub.s32 %s25, %s32
    %p275 = scmp.eq.s32.totalorder %s274, 0
    %s277 = sadd.s32 %s276, 1
    %s278 = scalar_select %p275, %s276, %s277
    %p281 = pneg %p275
    %p282 = scmp.eq.s32.totalorder %s17, 1
    %p283 = por %p281, %p282
    %p284 = scmp.ne.s32.totalorder %s276, %s279
    %p285 = scmp.eq.s32.totalorder %s17, 0
    %p286 = por %p284, %p285
    %p287 = scmp.ne.s32.totalorder %s276, %s279
    %p288 = scmp.eq.s32.totalorder %s22, 1
    %p289 = por %p287, %p288
    %p290 = scmp.ne.s32.totalorder %s279, %s280
    %p291 = scmp.eq.s32.totalorder %s22, 0
    %p292 = por %p290, %p291
    %p293 = scmp.ne.s32.totalorder %s279, %s280
    %p294 = scmp.eq.s32.totalorder %s23, 1
    %p295 = por %p293, %p294
    %p297 = scmp.ne.s32.totalorder %s280, %s296
    %p298 = scmp.eq.s32.totalorder %s23, 0
    %p299 = por %p297, %p298
    %s300 = ssub.s32 %s24, %s36
    %s301 = ssub.s32 %s25, %s32
    %s302 = sor.u32 %s300, %s301
    %p303 = scmp.eq.s32.totalorder %s302, 0
    %s305 = sadd.s32 %s304, 1
    %s306 = scalar_select %p303, %s304, %s305
    %p309 = pneg %p303
    %p310 = scmp.eq.s32.totalorder %s17, 1
    %p311 = por %p309, %p310
    %p312 = scmp.ne.s32.totalorder %s304, %s307
    %p313 = scmp.eq.s32.totalorder %s17, 0
    %p314 = por %p312, %p313
    %p315 = scmp.ne.s32.totalorder %s304, %s307
    %p316 = scmp.eq.s32.totalorder %s22, 1
    %p317 = por %p315, %p316
    %p318 = scmp.ne.s32.totalorder %s307, %s308
    %p319 = scmp.eq.s32.totalorder %s22, 0
    %p320 = por %p318, %p319
    %p321 = scmp.ne.s32.totalorder %s307, %s308
    %p322 = scmp.eq.s32.totalorder %s23, 1
    %p323 = por %p321, %p322
    %p325 = scmp.ne.s32.totalorder %s308, %s324
    %p326 = scmp.eq.s32.totalorder %s23, 0
    %p327 = por %p325, %p326
    %p328 = scmp.le.s32.totalorder 1, %s17
    %p329 = scmp.lt.s32.totalorder %s17, 3
    %p330 = pnand %p328, %p329
    %p331 = pneg %p330
    // Predicated region
    $region9: #{tpu_custom_call.1} parent=5 // pred_check
      _
    $region10: #{tpu_custom_call.1} parent=5 // pred_check_branch
      %333 = sbr.rel (%p330) target = $region12
    $region11: #{tpu_custom_call.1} parent=5 // pred_region
      %s334 = ssub.s32 %s17, 1
      // Predicated region
      $region13: #{tpu_custom_call.1} parent=11 // pred_check
        %p335 = pneg %p104
      $region14: #{tpu_custom_call.1} parent=11 // pred_check_branch
        %337 = sbr.rel (%p335) target = $region16
      $region15: #{tpu_custom_call.1} parent=11 // pred_region
        _
      $region16: #{tpu_custom_call.1} parent=11 // pred_fallthru
        _
      // Predicated region
      $region17: #{tpu_custom_call.1} parent=11 // pred_check
        %p338 = pneg %p125
      $region18: #{tpu_custom_call.1} parent=11 // pred_check_branch
        %340 = sbr.rel (%p338) target = $region20
      $region19: #{tpu_custom_call.1} parent=11 // pred_region
        _
      $region20: #{tpu_custom_call.1} parent=11 // pred_fallthru
        _
      // Predicated region
      $region21: #{tpu_custom_call.1} parent=11 // pred_check
        %p341 = pneg %p146
      $region22: #{tpu_custom_call.1} parent=11 // pred_check_branch
        %343 = sbr.rel (%p341) target = $region24
      $region23: #{tpu_custom_call.1} parent=11 // pred_region
        _
      $region24: #{tpu_custom_call.1} parent=11 // pred_fallthru
        _
      // Predicated region
      $region25: #{tpu_custom_call.1} parent=11 // pred_check
        %p344 = pneg %p172
      $region26: #{tpu_custom_call.1} parent=11 // pred_check_branch
        %346 = sbr.rel (%p344) target = $region28
      $region27: #{tpu_custom_call.1} parent=11 // pred_region
        %s347 = smul.u32 16, %s27
        %p348 = scmp.lt.s32.totalorder %s347, 15
        %s349 = scalar_select %p348, %s347, 15
        %s350 = smul.addr %s349, 8
        %s351 = scalar_lea.vmem %s5, %s350
        %s352 = smul.u32 16, %s27
      $region28: #{tpu_custom_call.1} parent=11 // pred_fallthru
        _
      // Predicated region
      $region29: #{tpu_custom_call.1} parent=11 // pred_check
        %p353 = pneg %p198
      $region30: #{tpu_custom_call.1} parent=11 // pred_check_branch
        %355 = sbr.rel (%p353) target = $region32
      $region31: #{tpu_custom_call.1} parent=11 // pred_region
        %s356 = smul.u32 16, %s27
        %p357 = scmp.lt.s32.totalorder %s356, 15
        %s358 = scalar_select %p357, %s356, 15
        %s359 = smul.addr %s358, 8
        %s360 = scalar_lea.vmem %s6, %s359
        %s361 = smul.u32 16, %s27
      $region32: #{tpu_custom_call.1} parent=11 // pred_fallthru
        _
      // Predicated region
      $region33: #{tpu_custom_call.1} parent=11 // pred_check
        %p362 = pneg %p219
      $region34: #{tpu_custom_call.1} parent=11 // pred_check_branch
        %364 = sbr.rel (%p362) target = $region36
      $region35: #{tpu_custom_call.1} parent=11 // pred_region
        _
      $region36: #{tpu_custom_call.1} parent=11 // pred_fallthru
        _
      // Predicated region
      $region37: #{tpu_custom_call.1} parent=11 // pred_check
        %p365 = pneg %p240
      $region38: #{tpu_custom_call.1} parent=11 // pred_check_branch
        %367 = sbr.rel (%p365) target = $region40
      $region39: #{tpu_custom_call.1} parent=11 // pred_region
        _
      $region40: #{tpu_custom_call.1} parent=11 // pred_fallthru
        _
      // Predicated region
      $region41: #{tpu_custom_call.1} parent=11 // pred_check
        %p368 = pneg %p266
      $region42: #{tpu_custom_call.1} parent=11 // pred_check_branch
        %370 = sbr.rel (%p368) target = $region44
      $region43: #{tpu_custom_call.1} parent=11 // pred_region
        %s371 = smul.u32 16, %s27
        %p372 = scmp.lt.s32.totalorder %s371, 15
        %s373 = scalar_select %p372, %s371, 15
        %s374 = smul.addr %s373, 8
        %s375 = scalar_lea.vmem %s9, %s374
        %s376 = smul.u32 16, %s27
      $region44: #{tpu_custom_call.1} parent=11 // pred_fallthru
        _
      // Predicated region
      $region45: #{tpu_custom_call.1} parent=11 // pred_check
        %p377 = pneg %p292
      $region46: #{tpu_custom_call.1} parent=11 // pred_check_branch
        %379 = sbr.rel (%p377) target = $region48
      $region47: #{tpu_custom_call.1} parent=11 // pred_region
        %s380 = smul.u32 16, %s27
        %p381 = scmp.lt.s32.totalorder %s380, 15
        %s382 = scalar_select %p381, %s380, 15
        %s383 = smul.addr %s382, 8
        %s384 = scalar_lea.vmem %s10, %s383
        %s385 = smul.u32 16, %s27
      $region48: #{tpu_custom_call.1} parent=11 // pred_fallthru
        _
    $region12: #{tpu_custom_call.1} parent=5 // pred_fallthru
      _
    %p386 = scmp.lt.s32.totalorder %s17, 2
    // Predicated region
    $region49: #{tpu_custom_call.1} parent=5 // pred_check
      %p387 = pneg %p386
    $region50: #{tpu_custom_call.1} parent=5 // pred_check_branch
      %389 = sbr.rel (%p387) target = $region52
    $region51: #{tpu_custom_call.1} parent=5 // pred_region
      // Predicated region
      $region53: #{tpu_custom_call.1} parent=51 // pred_check
        %p390 = pneg %p49
      $region54: #{tpu_custom_call.1} parent=51 // pred_check_branch
        %392 = sbr.rel (%p390) target = $region56
      $region55: #{tpu_custom_call.1} parent=51 // pred_region
        %p393 = scmp.lt.s32.totalorder %s24, 1
        %s394 = scalar_select %p393, %s24, 1
        %s395 = smul.addr %s394, 16
        %s396 = smul.addr %s395, 8
        %s397 = scalar_lea.vmem %s0, %s396
      $region56: #{tpu_custom_call.1} parent=51 // pred_fallthru
        _
      // Predicated region
      $region57: #{tpu_custom_call.1} parent=51 // pred_check
        %p398 = pneg %p77
      $region58: #{tpu_custom_call.1} parent=51 // pred_check_branch
        %400 = sbr.rel (%p398) target = $region60
      $region59: #{tpu_custom_call.1} parent=51 // pred_region
        %s401 = smul.u32 16, %s25
        %p402 = scmp.lt.s32.totalorder %s24, 1
        %s403 = scalar_select %p402, %s24, 1
        %p404 = scmp.lt.s32.totalorder %s401, 15
        %s405 = scalar_select %p404, %s401, 15
        %s406 = smul.addr %s403, 16
        %s407 = sadd.s32 %s405, %s406
        %s408 = smul.addr %s407, 4
        %s409 = scalar_lea.vmem %s1, %s408
        %s410 = smul.u32 16, %s25
      $region60: #{tpu_custom_call.1} parent=51 // pred_fallthru
        _
    $region52: #{tpu_custom_call.1} parent=5 // pred_fallthru
      _
    %p411 = scmp.le.s32.totalorder 1, %s17
    %p412 = scmp.lt.s32.totalorder %s17, 3
    %p413 = pnand %p411, %p412
    %p414 = pneg %p413
    // Predicated region
    $region61: #{tpu_custom_call.1} parent=5 // pred_check
      _
    $region62: #{tpu_custom_call.1} parent=5 // pred_check_branch
      %416 = sbr.rel (%p413) target = $region64
    $region63: #{tpu_custom_call.1} parent=5 // pred_region
      %s417 = ssub.s32 %s17, 1
      %p418 = scmp.lt.s32.totalorder %s26, 1
      %s419 = scalar_select %p418, %s26, 1
      %s420 = smul.addr %s419, 16
      %s421 = smul.addr %s420, 8
      %s422 = scalar_lea.vmem %s0, %s421
      %p423 = pneg %p55
      %p424 = pneg %p52
      %s425 = smul.u32 16, %s27
      %p426 = scmp.lt.s32.totalorder %s26, 1
      %s427 = scalar_select %p426, %s26, 1
      %p428 = scmp.lt.s32.totalorder %s425, 15
      %s429 = scalar_select %p428, %s425, 15
      %s430 = smul.addr %s427, 16
      %s431 = sadd.s32 %s429, %s430
      %s432 = smul.addr %s431, 4
      %s433 = scalar_lea.vmem %s1, %s432
      %p434 = pneg %p83
      %p435 = pneg %p80
      %p436 = pneg %p104
      %p437 = pneg %p101
      %p438 = pneg %p125
      %p439 = pneg %p122
      %p440 = pneg %p146
      %p441 = pneg %p143
      %s442 = smul.u32 16, %s27
      %p443 = scmp.lt.s32.totalorder %s442, 15
      %s444 = scalar_select %p443, %s442, 15
      %s445 = smul.addr %s444, 8
      %s446 = scalar_lea.vmem %s5, %s445
      %p447 = pneg %p172
      %p448 = pneg %p169
      %s449 = smul.u32 16, %s27
      %p450 = scmp.lt.s32.totalorder %s449, 15
      %s451 = scalar_select %p450, %s449, 15
      %s452 = smul.addr %s451, 8
      %s453 = scalar_lea.vmem %s6, %s452
      %p454 = pneg %p198
      %p455 = pneg %p195
      %p456 = pneg %p219
      %p457 = pneg %p216
      %p458 = pneg %p240
      %p459 = pneg %p237
      %s460 = smul.u32 16, %s27
      %p461 = scmp.lt.s32.totalorder %s460, 15
      %s462 = scalar_select %p461, %s460, 15
      %s463 = smul.addr %s462, 8
      %s464 = scalar_lea.vmem %s9, %s463
      %p465 = pneg %p266
      %p466 = pneg %p263
      %s467 = smul.u32 16, %s27
      %p468 = scmp.lt.s32.totalorder %s467, 15
      %s469 = scalar_select %p468, %s467, 15
      %s470 = smul.addr %s469, 8
      %s471 = scalar_lea.vmem %s10, %s470
      %p472 = pneg %p292
      %p473 = pneg %p289
      %p474 = pneg %p320
      %p475 = pneg %p317
      %s476 = smul.u32 16, %s27
      %p477 = scmp.lt.s32.totalorder %s26, 1
      %s478 = scalar_select %p477, %s26, 1
      %p479 = scmp.lt.s32.totalorder %s476, 15
      %s480 = scalar_select %p479, %s476, 15
      %s481 = smul.addr %s478, 16
      %s482 = sadd.s32 %s480, %s481
      %s483 = smul.addr %s482, 8
      %s484 = scalar_lea.vmem %s11, %s483
      %p485 = scmp.lt.s32.totalorder %s26, 1
      %s486 = scalar_select %p485, %s26, 1
      %s487 = smul.addr %s486, 16
      %s488 = smul.addr %s487, 8
      %s489 = scalar_lea.vmem %s0, %s488
      %s490 = smul.u32 16, %s27
      %p491 = scmp.lt.s32.totalorder %s26, 1
      %s492 = scalar_select %p491, %s26, 1
      %p493 = scmp.lt.s32.totalorder %s490, 15
      %s494 = scalar_select %p493, %s490, 15
      %s495 = smul.addr %s492, 16
      %s496 = sadd.s32 %s494, %s495
      %s497 = smul.addr %s496, 4
      %s498 = scalar_lea.vmem %s1, %s497
      %s499 = smul.u32 16, %s27
      %s500 = smul.u32 16, %s27
      %p501 = scmp.lt.s32.totalorder %s500, 15
      %s502 = scalar_select %p501, %s500, 15
      %s503 = smul.addr %s502, 8
      %s504 = scalar_lea.vmem %s5, %s503
      %s505 = smul.u32 16, %s27
      %s506 = smul.u32 16, %s27
      %p507 = scmp.lt.s32.totalorder %s506, 15
      %s508 = scalar_select %p507, %s506, 15
      %s509 = smul.addr %s508, 8
      %s510 = scalar_lea.vmem %s6, %s509
      %s511 = smul.u32 16, %s27
      %s512 = smul.u32 16, %s27
      %p513 = scmp.lt.s32.totalorder %s512, 15
      %s514 = scalar_select %p513, %s512, 15
      %s515 = smul.addr %s514, 8
      %s516 = scalar_lea.vmem %s9, %s515
      %s517 = smul.u32 16, %s27
      %s518 = smul.u32 16, %s27
      %p519 = scmp.lt.s32.totalorder %s518, 15
      %s520 = scalar_select %p519, %s518, 15
      %s521 = smul.addr %s520, 8
      %s522 = scalar_lea.vmem %s10, %s521
      %s523 = smul.u32 16, %s27
      %s524 = smul.u32 16, %s27
      %p525 = scmp.lt.s32.totalorder %s26, 1
      %s526 = scalar_select %p525, %s26, 1
      %p527 = scmp.lt.s32.totalorder %s524, 15
      %s528 = scalar_select %p527, %s524, 15
      %s529 = smul.addr %s526, 16
      %s530 = sadd.s32 %s528, %s529
      %s531 = smul.addr %s530, 8
      %s532 = scalar_lea.vmem %s11, %s531
      %s533 = smul.u32 16, %s27
      %s535 = smul.u32 %s27, 128
      %v536 = vld [vmem:[%s489] sm:$0xff]
      %v537 = vld [vmem:[%s489 + $0x8] sm:$0xff]
      %v538 = vld [vmem:[%s489 + $0x10] sm:$0xff]
      %v539 = vld [vmem:[%s489 + $0x18] sm:$0xff]
      %v540 = vld [vmem:[%s489 + $0x20] sm:$0xff]
      %v541 = vld [vmem:[%s489 + $0x28] sm:$0xff]
      %v542 = vld [vmem:[%s489 + $0x30] sm:$0xff]
      %v543 = vld [vmem:[%s489 + $0x38] sm:$0xff]
      %v544 = vld [vmem:[%s489 + $0x40] sm:$0xff]
      %v545 = vld [vmem:[%s489 + $0x48] sm:$0xff]
      %v546 = vld [vmem:[%s489 + $0x50] sm:$0xff]
      %v547 = vld [vmem:[%s489 + $0x58] sm:$0xff]
      %v548 = vld [vmem:[%s489 + $0x60] sm:$0xff]
      %v549 = vld [vmem:[%s489 + $0x68] sm:$0xff]
      %v550 = vld [vmem:[%s489 + $0x70] sm:$0xff]
      %v551 = vld [vmem:[%s489 + $0x78] sm:$0xff]
      %s552 = scalar_lea.vmem %s489, %s535
      %v553 = vld [vmem:[%s552] sm:$0xff]
      %v554 = vld [vmem:[%s552 + $0x8] sm:$0xff]
      %v555 = vld [vmem:[%s552 + $0x10] sm:$0xff]
      %v556 = vld [vmem:[%s552 + $0x18] sm:$0xff]
      %v557 = vld [vmem:[%s552 + $0x20] sm:$0xff]
      %v558 = vld [vmem:[%s552 + $0x28] sm:$0xff]
      %v559 = vld [vmem:[%s552 + $0x30] sm:$0xff]
      %v560 = vld [vmem:[%s552 + $0x38] sm:$0xff]
      %v561 = vld [vmem:[%s552 + $0x40] sm:$0xff]
      %v562 = vld [vmem:[%s552 + $0x48] sm:$0xff]
      %v563 = vld [vmem:[%s552 + $0x50] sm:$0xff]
      %v564 = vld [vmem:[%s552 + $0x58] sm:$0xff]
      %v565 = vld [vmem:[%s552 + $0x60] sm:$0xff]
      %v566 = vld [vmem:[%s552 + $0x68] sm:$0xff]
      %v567 = vld [vmem:[%s552 + $0x70] sm:$0xff]
      %v568 = vld [vmem:[%s552 + $0x78] sm:$0xff]
      %v569 = vld [vmem:[%s498] sm:$0xf]
      %v570 = vld [vmem:[%s498 + $0x4] sm:$0xf]
      %v571 = vld [vmem:[%s498 + $0x8] sm:$0xf]
      %v572 = vld [vmem:[%s498 + $0xc] sm:$0xf]
      %v573 = vld [vmem:[%s498 + $0x10] sm:$0xf]
      %v574 = vld [vmem:[%s498 + $0x14] sm:$0xf]
      %v575 = vld [vmem:[%s498 + $0x18] sm:$0xf]
      %v576 = vld [vmem:[%s498 + $0x1c] sm:$0xf]
      %v577 = vld [vmem:[%s498 + $0x20] sm:$0xf]
      %v578 = vld [vmem:[%s498 + $0x24] sm:$0xf]
      %v579 = vld [vmem:[%s498 + $0x28] sm:$0xf]
      %v580 = vld [vmem:[%s498 + $0x2c] sm:$0xf]
      %v581 = vld [vmem:[%s498 + $0x30] sm:$0xf]
      %v582 = vld [vmem:[%s498 + $0x34] sm:$0xf]
      %v583 = vld [vmem:[%s498 + $0x38] sm:$0xf]
      %v584 = vld [vmem:[%s498 + $0x3c] sm:$0xf]
      %v585 = vpack.c.bf16 %v537, %v536
      %v586 = vpack.c.bf16 %v539, %v538
      %v587 = vpack.c.bf16 %v541, %v540
      %v588 = vpack.c.bf16 %v543, %v542
      %v589 = vpack.c.bf16 %v545, %v544
      %v590 = vpack.c.bf16 %v547, %v546
      %v591 = vpack.c.bf16 %v549, %v548
      %v592 = vpack.c.bf16 %v551, %v550
      %v609 = vunpack.c.l.b16 %v569
      %v610 = vunpack.c.l.b16 %v570
      %v611 = vunpack.c.l.b16 %v571
      %v612 = vunpack.c.l.b16 %v572
      %v613 = vunpack.c.l.b16 %v573
      %v614 = vunpack.c.l.b16 %v574
      %v615 = vunpack.c.l.b16 %v575
      %v616 = vunpack.c.l.b16 %v576
      %v617 = vunpack.c.l.b16 %v577
      %v618 = vunpack.c.l.b16 %v578
      %v619 = vunpack.c.l.b16 %v579
      %v620 = vunpack.c.l.b16 %v580
      %v621 = vunpack.c.l.b16 %v581
      %v622 = vunpack.c.l.b16 %v582
      %v623 = vunpack.c.l.b16 %v583
      %v624 = vunpack.c.l.b16 %v584
      %v625 = vpack.c.b16 %v610, %v609
      %v626 = vpack.c.b16 %v612, %v611
      %v627 = vpack.c.b16 %v614, %v613
      %v628 = vpack.c.b16 %v616, %v615
      %v629 = vpack.c.b16 %v618, %v617
      %v630 = vpack.c.b16 %v620, %v619
      %v631 = vpack.c.b16 %v622, %v621
      %v632 = vpack.c.b16 %v624, %v623
      %641 = vmatpush.bf16.msra.mxu0 %v592
      %642 = vmatpush.bf16.msra.mxu0 %v591
      %643 = vmatpush.bf16.msra.mxu0 %v590
      %644 = vmatpush.bf16.msra.mxu0 %v589
      %645 = vmatpush.bf16.msra.mxu0 %v588
      %646 = vmatpush.bf16.msra.mxu0 %v587
      %647 = vmatpush.bf16.msra.mxu0 %v586
      %648 = vmatpush.bf16.msra.mxu0 %v585
      %649 = vmatmul.bf16.gmra.mxu0 %v625
      %v650 = vpop.f32.mrf.mxu0
      %v651 = vadd.f32 0.0, %v650
      %v652 = vpop.f32.mrf.mxu0
      %v653 = vadd.f32 0.0, %v652
      %654 = vmatmul.bf16.gmra.mxu0 %v626
      %v655 = vpop.f32.mrf.mxu0
      %v656 = vadd.f32 0.0, %v655
      %v657 = vpop.f32.mrf.mxu0
      %v658 = vadd.f32 0.0, %v657
      %659 = vmatmul.bf16.gmra.mxu0 %v627
      %v660 = vpop.f32.mrf.mxu0
      %v661 = vadd.f32 0.0, %v660
      %v662 = vpop.f32.mrf.mxu0
      %v663 = vadd.f32 0.0, %v662
      %664 = vmatmul.bf16.gmra.mxu0 %v628
      %v665 = vpop.f32.mrf.mxu0
      %v666 = vadd.f32 0.0, %v665
      %v667 = vpop.f32.mrf.mxu0
      %v668 = vadd.f32 0.0, %v667
      %669 = vmatmul.bf16.gmra.mxu0 %v629
      %v670 = vpop.f32.mrf.mxu0
      %v671 = vadd.f32 0.0, %v670
      %v672 = vpop.f32.mrf.mxu0
      %v673 = vadd.f32 0.0, %v672
      %674 = vmatmul.bf16.gmra.mxu0 %v630
      %v675 = vpop.f32.mrf.mxu0
      %v676 = vadd.f32 0.0, %v675
      %v677 = vpop.f32.mrf.mxu0
      %v678 = vadd.f32 0.0, %v677
      %679 = vmatmul.bf16.gmra.mxu0 %v631
      %v680 = vpop.f32.mrf.mxu0
      %v681 = vadd.f32 0.0, %v680
      %v682 = vpop.f32.mrf.mxu0
      %v683 = vadd.f32 0.0, %v682
      %684 = vmatmul.bf16.gmra.mxu0 %v632
      %v685 = vpop.f32.mrf.mxu0
      %v686 = vadd.f32 0.0, %v685
      %v687 = vpop.f32.mrf.mxu0
      %v688 = vadd.f32 0.0, %v687
      %689 = vdwg.mxu0
      %v690 = vunpack.c.l.bf16 %v569
      %v691 = vunpack.c.l.bf16 %v570
      %v692 = vunpack.c.l.bf16 %v571
      %v693 = vunpack.c.l.bf16 %v572
      %v694 = vunpack.c.l.bf16 %v573
      %v695 = vunpack.c.l.bf16 %v574
      %v696 = vunpack.c.l.bf16 %v575
      %v697 = vunpack.c.l.bf16 %v576
      %v698 = vunpack.c.l.bf16 %v577
      %v699 = vunpack.c.l.bf16 %v578
      %v700 = vunpack.c.l.bf16 %v579
      %v701 = vunpack.c.l.bf16 %v580
      %v702 = vunpack.c.l.bf16 %v581
      %v703 = vunpack.c.l.bf16 %v582
      %v704 = vunpack.c.l.bf16 %v583
      %v705 = vunpack.c.l.bf16 %v584
      %706 = vadd.xlane.f32.xlu0 %v690
      %v707 = vpop.xlane.xlu0 %706
      %708 = vadd.xlane.f32.xlu0 %v691
      %v709 = vpop.xlane.xlu0 %708
      %710 = vadd.xlane.f32.xlu0 %v692
      %v711 = vpop.xlane.xlu0 %710
      %712 = vadd.xlane.f32.xlu0 %v693
      %v713 = vpop.xlane.xlu0 %712
      %714 = vadd.xlane.f32.xlu0 %v694
      %v715 = vpop.xlane.xlu0 %714
      %716 = vadd.xlane.f32.xlu0 %v695
      %v717 = vpop.xlane.xlu0 %716
      %718 = vadd.xlane.f32.xlu0 %v696
      %v719 = vpop.xlane.xlu0 %718
      %720 = vadd.xlane.f32.xlu0 %v697
      %v721 = vpop.xlane.xlu0 %720
      %722 = vadd.xlane.f32.xlu0 %v698
      %v723 = vpop.xlane.xlu0 %722
      %724 = vadd.xlane.f32.xlu0 %v699
      %v725 = vpop.xlane.xlu0 %724
      %726 = vadd.xlane.f32.xlu0 %v700
      %v727 = vpop.xlane.xlu0 %726
      %728 = vadd.xlane.f32.xlu0 %v701
      %v729 = vpop.xlane.xlu0 %728
      %730 = vadd.xlane.f32.xlu0 %v702
      %v731 = vpop.xlane.xlu0 %730
      %732 = vadd.xlane.f32.xlu0 %v703
      %v733 = vpop.xlane.xlu0 %732
      %734 = vadd.xlane.f32.xlu0 %v704
      %v735 = vpop.xlane.xlu0 %734
      %736 = vadd.xlane.f32.xlu0 %v705
      %v737 = vpop.xlane.xlu0 %736
      %v738 = vmax.f32 %v707, 1.0
      %v739 = vmax.f32 %v709, 1.0
      %v740 = vmax.f32 %v711, 1.0
      %v741 = vmax.f32 %v713, 1.0
      %v742 = vmax.f32 %v715, 1.0
      %v743 = vmax.f32 %v717, 1.0
      %v744 = vmax.f32 %v719, 1.0
      %v745 = vmax.f32 %v721, 1.0
      %v746 = vmax.f32 %v723, 1.0
      %v747 = vmax.f32 %v725, 1.0
      %v748 = vmax.f32 %v727, 1.0
      %v749 = vmax.f32 %v729, 1.0
      %v750 = vmax.f32 %v731, 1.0
      %v751 = vmax.f32 %v733, 1.0
      %v752 = vmax.f32 %v735, 1.0
      %v753 = vmax.f32 %v737, 1.0
      %v754 = vrcp.pop %v738
      %v755 = vrcp.pop %v739
      %v756 = vrcp.pop %v740
      %v757 = vrcp.pop %v741
      %v758 = vrcp.pop %v742
      %v759 = vrcp.pop %v743
      %v760 = vrcp.pop %v744
      %v761 = vrcp.pop %v745
      %v762 = vrcp.pop %v746
      %v763 = vrcp.pop %v747
      %v764 = vrcp.pop %v748
      %v765 = vrcp.pop %v749
      %v766 = vrcp.pop %v750
      %v767 = vrcp.pop %v751
      %v768 = vrcp.pop %v752
      %v769 = vrcp.pop %v753
      %v770 = vmul.f32 %v651, %v754
      %v771 = vmul.f32 %v653, %v755
      %v772 = vmul.f32 %v656, %v756
      %v773 = vmul.f32 %v658, %v757
      %v774 = vmul.f32 %v661, %v758
      %v775 = vmul.f32 %v663, %v759
      %v776 = vmul.f32 %v666, %v760
      %v777 = vmul.f32 %v668, %v761
      %v778 = vmul.f32 %v671, %v762
      %v779 = vmul.f32 %v673, %v763
      %v780 = vmul.f32 %v676, %v764
      %v781 = vmul.f32 %v678, %v765
      %v782 = vmul.f32 %v681, %v766
      %v783 = vmul.f32 %v683, %v767
      %v784 = vmul.f32 %v686, %v768
      %v785 = vmul.f32 %v688, %v769
      %v786 = vpack.c.bf16 %v771, %v770
      %v787 = vpack.c.bf16 %v773, %v772
      %v788 = vpack.c.bf16 %v775, %v774
      %v789 = vpack.c.bf16 %v777, %v776
      %v790 = vpack.c.bf16 %v779, %v778
      %v791 = vpack.c.bf16 %v781, %v780
      %v792 = vpack.c.bf16 %v783, %v782
      %v793 = vpack.c.bf16 %v785, %v784
      %v794 = vld [vmem:[%s2] sm:$0xff]
      %v795 = vpack.c.bf16 %v794, %v794
      %v796 = vpack.c.bf16 %v554, %v553
      %v797 = vpack.c.bf16 %v556, %v555
      %v798 = vpack.c.bf16 %v558, %v557
      %v799 = vpack.c.bf16 %v560, %v559
      %v800 = vpack.c.bf16 %v562, %v561
      %v801 = vpack.c.bf16 %v564, %v563
      %v802 = vpack.c.bf16 %v566, %v565
      %v803 = vpack.c.bf16 %v568, %v567
      %v804 = vld [vmem:[%s3] sm:$0xff]
      %v805 = vpack.c.bf16 %v804, %v804
      %vm806 = vcmask 64512
      %v808 = vsel %vm806, %v796, 0
      %v811 = vsel %vm806, %v797, 0
      %v814 = vsel %vm806, %v798, 0
      %v817 = vsel %vm806, %v799, 0
      %v820 = vsel %vm806, %v800, 0
      %v823 = vsel %vm806, %v801, 0
      %v826 = vsel %vm806, %v802, 0
      %v829 = vsel %vm806, %v803, 0
      %vm831 = vcmask 1043456
      %v833 = vsel %vm831, %v805, 0
      %835 = vmatpush.bf16.msra.mxu0 0
      %836 = vmatpush.bf16.msra.mxu0 0
      %837 = vmatpush.bf16.msra.mxu0 0
      %838 = vmatpush.bf16.msra.mxu0 0
      %839 = vmatpush.bf16.msra.mxu0 0
      %840 = vmatpush.bf16.msra.mxu0 0
      %841 = vmatpush.bf16.msra.mxu0 0
      %842 = vmatpush.bf16.msra.mxu0 %v833
      %843 = vmatmul.bf16.gmra.mxu0 %v808
      %v844 = vpop.f32.mrf.mxu0
      %v845 = vadd.f32 0.0, %v844
      %v846 = vpop.f32.mrf.mxu0
      %v847 = vadd.f32 0.0, %v846
      %848 = vmatmul.bf16.gmra.mxu0 %v811
      %v849 = vpop.f32.mrf.mxu0
      %v850 = vadd.f32 0.0, %v849
      %v851 = vpop.f32.mrf.mxu0
      %v852 = vadd.f32 0.0, %v851
      %853 = vmatmul.bf16.gmra.mxu0 %v814
      %v854 = vpop.f32.mrf.mxu0
      %v855 = vadd.f32 0.0, %v854
      %v856 = vpop.f32.mrf.mxu0
      %v857 = vadd.f32 0.0, %v856
      %858 = vmatmul.bf16.gmra.mxu0 %v817
      %v859 = vpop.f32.mrf.mxu0
      %v860 = vadd.f32 0.0, %v859
      %v861 = vpop.f32.mrf.mxu0
      %v862 = vadd.f32 0.0, %v861
      %863 = vmatmul.bf16.gmra.mxu0 %v820
      %v864 = vpop.f32.mrf.mxu0
      %v865 = vadd.f32 0.0, %v864
      %v866 = vpop.f32.mrf.mxu0
      %v867 = vadd.f32 0.0, %v866
      %868 = vmatmul.bf16.gmra.mxu0 %v823
      %v869 = vpop.f32.mrf.mxu0
      %v870 = vadd.f32 0.0, %v869
      %v871 = vpop.f32.mrf.mxu0
      %v872 = vadd.f32 0.0, %v871
      %873 = vmatmul.bf16.gmra.mxu0 %v826
      %v874 = vpop.f32.mrf.mxu0
      %v875 = vadd.f32 0.0, %v874
      %v876 = vpop.f32.mrf.mxu0
      %v877 = vadd.f32 0.0, %v876
      %878 = vmatmul.bf16.gmra.mxu0 %v829
      %v879 = vpop.f32.mrf.mxu0
      %v880 = vadd.f32 0.0, %v879
      %v881 = vpop.f32.mrf.mxu0
      %v882 = vadd.f32 0.0, %v881
      %883 = vdwg.mxu0
      %v885 = vsel %vm806, %v786, 0
      %v888 = vsel %vm806, %v787, 0
      %v891 = vsel %vm806, %v788, 0
      %v894 = vsel %vm806, %v789, 0
      %v897 = vsel %vm806, %v790, 0
      %v900 = vsel %vm806, %v791, 0
      %v903 = vsel %vm806, %v792, 0
      %v906 = vsel %vm806, %v793, 0
      %v909 = vsel %vm831, %v795, 0
      %911 = vmatpush.bf16.msra.mxu0 0
      %912 = vmatpush.bf16.msra.mxu0 0
      %913 = vmatpush.bf16.msra.mxu0 0
      %914 = vmatpush.bf16.msra.mxu0 0
      %915 = vmatpush.bf16.msra.mxu0 0
      %916 = vmatpush.bf16.msra.mxu0 0
      %917 = vmatpush.bf16.msra.mxu0 0
      %918 = vmatpush.bf16.msra.mxu0 %v909
      %919 = vmatmul.bf16.gmra.mxu0 %v885
      %v920 = vpop.f32.mrf.mxu0
      %v921 = vadd.f32 %v845, %v920
      %v922 = vpop.f32.mrf.mxu0
      %v923 = vadd.f32 %v847, %v922
      %924 = vmatmul.bf16.gmra.mxu0 %v888
      %v925 = vpop.f32.mrf.mxu0
      %v926 = vadd.f32 %v850, %v925
      %v927 = vpop.f32.mrf.mxu0
      %v928 = vadd.f32 %v852, %v927
      %929 = vmatmul.bf16.gmra.mxu0 %v891
      %v930 = vpop.f32.mrf.mxu0
      %v931 = vadd.f32 %v855, %v930
      %v932 = vpop.f32.mrf.mxu0
      %v933 = vadd.f32 %v857, %v932
      %934 = vmatmul.bf16.gmra.mxu0 %v894
      %v935 = vpop.f32.mrf.mxu0
      %v936 = vadd.f32 %v860, %v935
      %v937 = vpop.f32.mrf.mxu0
      %v938 = vadd.f32 %v862, %v937
      %939 = vmatmul.bf16.gmra.mxu0 %v897
      %v940 = vpop.f32.mrf.mxu0
      %v941 = vadd.f32 %v865, %v940
      %v942 = vpop.f32.mrf.mxu0
      %v943 = vadd.f32 %v867, %v942
      %944 = vmatmul.bf16.gmra.mxu0 %v900
      %v945 = vpop.f32.mrf.mxu0
      %v946 = vadd.f32 %v870, %v945
      %v947 = vpop.f32.mrf.mxu0
      %v948 = vadd.f32 %v872, %v947
      %949 = vmatmul.bf16.gmra.mxu0 %v903
      %v950 = vpop.f32.mrf.mxu0
      %v951 = vadd.f32 %v875, %v950
      %v952 = vpop.f32.mrf.mxu0
      %v953 = vadd.f32 %v877, %v952
      %954 = vmatmul.bf16.gmra.mxu0 %v906
      %v955 = vpop.f32.mrf.mxu0
      %v956 = vadd.f32 %v880, %v955
      %v957 = vpop.f32.mrf.mxu0
      %v958 = vadd.f32 %v882, %v957
      %959 = vdwg.mxu0
      %v960 = vld [vmem:[%s4] sm:$0x1]
      %v962 = vperm.slane %v960, 0
      %v964 = vadd.f32 %v921, %v962
      %v965 = vadd.f32 %v923, %v962
      %v966 = vadd.f32 %v926, %v962
      %v967 = vadd.f32 %v928, %v962
      %v968 = vadd.f32 %v931, %v962
      %v969 = vadd.f32 %v933, %v962
      %v970 = vadd.f32 %v936, %v962
      %v971 = vadd.f32 %v938, %v962
      %v972 = vadd.f32 %v941, %v962
      %v973 = vadd.f32 %v943, %v962
      %v974 = vadd.f32 %v946, %v962
      %v975 = vadd.f32 %v948, %v962
      %v976 = vadd.f32 %v951, %v962
      %v977 = vadd.f32 %v953, %v962
      %v978 = vadd.f32 %v956, %v962
      %v979 = vadd.f32 %v958, %v962
      %v980 = vtanh.pop %v964
      %v981 = vtanh.pop %v965
      %v982 = vtanh.pop %v966
      %v983 = vtanh.pop %v967
      %v984 = vtanh.pop %v968
      %v985 = vtanh.pop %v969
      %v986 = vtanh.pop %v970
      %v987 = vtanh.pop %v971
      %v988 = vtanh.pop %v972
      %v989 = vtanh.pop %v973
      %v990 = vtanh.pop %v974
      %v991 = vtanh.pop %v975
      %v992 = vtanh.pop %v976
      %v993 = vtanh.pop %v977
      %v994 = vtanh.pop %v978
      %v995 = vtanh.pop %v979
      %v996 = vld [vmem:[%s504] sm:$0xff]
      %v997 = vld [vmem:[%s504 + $0x8] sm:$0xff]
      %v998 = vld [vmem:[%s504 + $0x10] sm:$0xff]
      %v999 = vld [vmem:[%s504 + $0x18] sm:$0xff]
      %v1000 = vld [vmem:[%s504 + $0x20] sm:$0xff]
      %v1001 = vld [vmem:[%s504 + $0x28] sm:$0xff]
      %v1002 = vld [vmem:[%s504 + $0x30] sm:$0xff]
      %v1003 = vld [vmem:[%s504 + $0x38] sm:$0xff]
      %v1004 = vld [vmem:[%s504 + $0x40] sm:$0xff]
      %v1005 = vld [vmem:[%s504 + $0x48] sm:$0xff]
      %v1006 = vld [vmem:[%s504 + $0x50] sm:$0xff]
      %v1007 = vld [vmem:[%s504 + $0x58] sm:$0xff]
      %v1008 = vld [vmem:[%s504 + $0x60] sm:$0xff]
      %v1009 = vld [vmem:[%s504 + $0x68] sm:$0xff]
      %v1010 = vld [vmem:[%s504 + $0x70] sm:$0xff]
      %v1011 = vld [vmem:[%s504 + $0x78] sm:$0xff]
      %1013 = vset.pattern.permute.xlu0 0
      %1014 = vperm.xlu0 %1013, %v996
      %v1015 = vpop.permute.xlu0 %1014
      %1018 = vset.pattern.permute.xlu0 0
      %1019 = vperm.xlu0 %1018, %v997
      %v1020 = vpop.permute.xlu0 %1019
      %1023 = vset.pattern.permute.xlu0 0
      %1024 = vperm.xlu0 %1023, %v998
      %v1025 = vpop.permute.xlu0 %1024
      %1028 = vset.pattern.permute.xlu0 0
      %1029 = vperm.xlu0 %1028, %v999
      %v1030 = vpop.permute.xlu0 %1029
      %1033 = vset.pattern.permute.xlu0 0
      %1034 = vperm.xlu0 %1033, %v1000
      %v1035 = vpop.permute.xlu0 %1034
      %1038 = vset.pattern.permute.xlu0 0
      %1039 = vperm.xlu0 %1038, %v1001
      %v1040 = vpop.permute.xlu0 %1039
      %1043 = vset.pattern.permute.xlu0 0
      %1044 = vperm.xlu0 %1043, %v1002
      %v1045 = vpop.permute.xlu0 %1044
      %1048 = vset.pattern.permute.xlu0 0
      %1049 = vperm.xlu0 %1048, %v1003
      %v1050 = vpop.permute.xlu0 %1049
      %1053 = vset.pattern.permute.xlu0 0
      %1054 = vperm.xlu0 %1053, %v1004
      %v1055 = vpop.permute.xlu0 %1054
      %1058 = vset.pattern.permute.xlu0 0
      %1059 = vperm.xlu0 %1058, %v1005
      %v1060 = vpop.permute.xlu0 %1059
      %1063 = vset.pattern.permute.xlu0 0
      %1064 = vperm.xlu0 %1063, %v1006
      %v1065 = vpop.permute.xlu0 %1064
      %1068 = vset.pattern.permute.xlu0 0
      %1069 = vperm.xlu0 %1068, %v1007
      %v1070 = vpop.permute.xlu0 %1069
      %1073 = vset.pattern.permute.xlu0 0
      %1074 = vperm.xlu0 %1073, %v1008
      %v1075 = vpop.permute.xlu0 %1074
      %1078 = vset.pattern.permute.xlu0 0
      %1079 = vperm.xlu0 %1078, %v1009
      %v1080 = vpop.permute.xlu0 %1079
      %1083 = vset.pattern.permute.xlu0 0
      %1084 = vperm.xlu0 %1083, %v1010
      %v1085 = vpop.permute.xlu0 %1084
      %1088 = vset.pattern.permute.xlu0 0
      %1089 = vperm.xlu0 %1088, %v1011
      %v1090 = vpop.permute.xlu0 %1089
      %v1092 = vmul.f32 %v980, %v1015
      %v1093 = vmul.f32 %v981, %v1020
      %v1094 = vmul.f32 %v982, %v1025
      %v1095 = vmul.f32 %v983, %v1030
      %v1096 = vmul.f32 %v984, %v1035
      %v1097 = vmul.f32 %v985, %v1040
      %v1098 = vmul.f32 %v986, %v1045
      %v1099 = vmul.f32 %v987, %v1050
      %v1100 = vmul.f32 %v988, %v1055
      %v1101 = vmul.f32 %v989, %v1060
      %v1102 = vmul.f32 %v990, %v1065
      %v1103 = vmul.f32 %v991, %v1070
      %v1104 = vmul.f32 %v992, %v1075
      %v1105 = vmul.f32 %v993, %v1080
      %v1106 = vmul.f32 %v994, %v1085
      %v1107 = vmul.f32 %v995, %v1090
      %v1108 = vld [vmem:[%s510] sm:$0xff]
      %v1109 = vld [vmem:[%s510 + $0x8] sm:$0xff]
      %v1110 = vld [vmem:[%s510 + $0x10] sm:$0xff]
      %v1111 = vld [vmem:[%s510 + $0x18] sm:$0xff]
      %v1112 = vld [vmem:[%s510 + $0x20] sm:$0xff]
      %v1113 = vld [vmem:[%s510 + $0x28] sm:$0xff]
      %v1114 = vld [vmem:[%s510 + $0x30] sm:$0xff]
      %v1115 = vld [vmem:[%s510 + $0x38] sm:$0xff]
      %v1116 = vld [vmem:[%s510 + $0x40] sm:$0xff]
      %v1117 = vld [vmem:[%s510 + $0x48] sm:$0xff]
      %v1118 = vld [vmem:[%s510 + $0x50] sm:$0xff]
      %v1119 = vld [vmem:[%s510 + $0x58] sm:$0xff]
      %v1120 = vld [vmem:[%s510 + $0x60] sm:$0xff]
      %v1121 = vld [vmem:[%s510 + $0x68] sm:$0xff]
      %v1122 = vld [vmem:[%s510 + $0x70] sm:$0xff]
      %v1123 = vld [vmem:[%s510 + $0x78] sm:$0xff]
      %1125 = vset.pattern.permute.xlu0 0
      %1126 = vperm.xlu0 %1125, %v1108
      %v1127 = vpop.permute.xlu0 %1126
      %1130 = vset.pattern.permute.xlu0 0
      %1131 = vperm.xlu0 %1130, %v1109
      %v1132 = vpop.permute.xlu0 %1131
      %1135 = vset.pattern.permute.xlu0 0
      %1136 = vperm.xlu0 %1135, %v1110
      %v1137 = vpop.permute.xlu0 %1136
      %1140 = vset.pattern.permute.xlu0 0
      %1141 = vperm.xlu0 %1140, %v1111
      %v1142 = vpop.permute.xlu0 %1141
      %1145 = vset.pattern.permute.xlu0 0
      %1146 = vperm.xlu0 %1145, %v1112
      %v1147 = vpop.permute.xlu0 %1146
      %1150 = vset.pattern.permute.xlu0 0
      %1151 = vperm.xlu0 %1150, %v1113
      %v1152 = vpop.permute.xlu0 %1151
      %1155 = vset.pattern.permute.xlu0 0
      %1156 = vperm.xlu0 %1155, %v1114
      %v1157 = vpop.permute.xlu0 %1156
      %1160 = vset.pattern.permute.xlu0 0
      %1161 = vperm.xlu0 %1160, %v1115
      %v1162 = vpop.permute.xlu0 %1161
      %1165 = vset.pattern.permute.xlu0 0
      %1166 = vperm.xlu0 %1165, %v1116
      %v1167 = vpop.permute.xlu0 %1166
      %1170 = vset.pattern.permute.xlu0 0
      %1171 = vperm.xlu0 %1170, %v1117
      %v1172 = vpop.permute.xlu0 %1171
      %1175 = vset.pattern.permute.xlu0 0
      %1176 = vperm.xlu0 %1175, %v1118
      %v1177 = vpop.permute.xlu0 %1176
      %1180 = vset.pattern.permute.xlu0 0
      %1181 = vperm.xlu0 %1180, %v1119
      %v1182 = vpop.permute.xlu0 %1181
      %1185 = vset.pattern.permute.xlu0 0
      %1186 = vperm.xlu0 %1185, %v1120
      %v1187 = vpop.permute.xlu0 %1186
      %1190 = vset.pattern.permute.xlu0 0
      %1191 = vperm.xlu0 %1190, %v1121
      %v1192 = vpop.permute.xlu0 %1191
      %1195 = vset.pattern.permute.xlu0 0
      %1196 = vperm.xlu0 %1195, %v1122
      %v1197 = vpop.permute.xlu0 %1196
      %1200 = vset.pattern.permute.xlu0 0
      %1201 = vperm.xlu0 %1200, %v1123
      %v1202 = vpop.permute.xlu0 %1201
      %v1204 = vadd.f32 %v1092, %v1127
      %v1205 = vadd.f32 %v1093, %v1132
      %v1206 = vadd.f32 %v1094, %v1137
      %v1207 = vadd.f32 %v1095, %v1142
      %v1208 = vadd.f32 %v1096, %v1147
      %v1209 = vadd.f32 %v1097, %v1152
      %v1210 = vadd.f32 %v1098, %v1157
      %v1211 = vadd.f32 %v1099, %v1162
      %v1212 = vadd.f32 %v1100, %v1167
      %v1213 = vadd.f32 %v1101, %v1172
      %v1214 = vadd.f32 %v1102, %v1177
      %v1215 = vadd.f32 %v1103, %v1182
      %v1216 = vadd.f32 %v1104, %v1187
      %v1217 = vadd.f32 %v1105, %v1192
      %v1218 = vadd.f32 %v1106, %v1197
      %v1219 = vadd.f32 %v1107, %v1202
      %v1220 = vpack.c.bf16 %v1205, %v1204
      %v1221 = vpack.c.bf16 %v1207, %v1206
      %v1222 = vpack.c.bf16 %v1209, %v1208
      %v1223 = vpack.c.bf16 %v1211, %v1210
      %v1224 = vpack.c.bf16 %v1213, %v1212
      %v1225 = vpack.c.bf16 %v1215, %v1214
      %v1226 = vpack.c.bf16 %v1217, %v1216
      %v1227 = vpack.c.bf16 %v1219, %v1218
      %v1228 = vld [vmem:[%s7] sm:$0xff]
      %v1229 = vld [vmem:[%s7 + $0x8] sm:$0xff]
      %v1230 = vld [vmem:[%s7 + $0x10] sm:$0xff]
      %v1231 = vld [vmem:[%s7 + $0x18] sm:$0xff]
      %v1232 = vpack.c.bf16 %v1229, %v1228
      %v1233 = vpack.c.bf16 %v1231, %v1230
      %v1234 = vld [vmem:[%s8] sm:$0x1]
      %v1236 = vperm.slane %v1234, 0
      %vm1238 = vcmask 261120
      %v1240 = vsel %vm1238, %v1220, 0
      %v1243 = vsel %vm1238, %v1221, 0
      %v1246 = vsel %vm1238, %v1222, 0
      %v1249 = vsel %vm1238, %v1223, 0
      %v1252 = vsel %vm1238, %v1224, 0
      %v1255 = vsel %vm1238, %v1225, 0
      %v1258 = vsel %vm1238, %v1226, 0
      %v1261 = vsel %vm1238, %v1227, 0
      %1263 = vmatpush.bf16.msra.mxu0 0
      %1264 = vmatpush.bf16.msra.mxu0 0
      %1265 = vmatpush.bf16.msra.mxu0 0
      %1266 = vmatpush.bf16.msra.mxu0 0
      %1267 = vmatpush.bf16.msra.mxu0 0
      %1268 = vmatpush.bf16.msra.mxu0 0
      %1269 = vmatpush.bf16.msra.mxu0 %v1233
      %1270 = vmatpush.bf16.msra.mxu0 %v1232
      %1271 = vmatmul.bf16.gmra.mxu0 %v1240
      %v1272 = vpop.f32.mrf.mxu0
      %v1273 = vadd.f32 %v1236, %v1272
      %v1274 = vpop.f32.mrf.mxu0
      %v1275 = vadd.f32 %v1236, %v1274
      %1276 = vmatmul.bf16.gmra.mxu0 %v1243
      %v1277 = vpop.f32.mrf.mxu0
      %v1278 = vadd.f32 %v1236, %v1277
      %v1279 = vpop.f32.mrf.mxu0
      %v1280 = vadd.f32 %v1236, %v1279
      %1281 = vmatmul.bf16.gmra.mxu0 %v1246
      %v1282 = vpop.f32.mrf.mxu0
      %v1283 = vadd.f32 %v1236, %v1282
      %v1284 = vpop.f32.mrf.mxu0
      %v1285 = vadd.f32 %v1236, %v1284
      %1286 = vmatmul.bf16.gmra.mxu0 %v1249
      %v1287 = vpop.f32.mrf.mxu0
      %v1288 = vadd.f32 %v1236, %v1287
      %v1289 = vpop.f32.mrf.mxu0
      %v1290 = vadd.f32 %v1236, %v1289
      %1291 = vmatmul.bf16.gmra.mxu0 %v1252
      %v1292 = vpop.f32.mrf.mxu0
      %v1293 = vadd.f32 %v1236, %v1292
      %v1294 = vpop.f32.mrf.mxu0
      %v1295 = vadd.f32 %v1236, %v1294
      %1296 = vmatmul.bf16.gmra.mxu0 %v1255
      %v1297 = vpop.f32.mrf.mxu0
      %v1298 = vadd.f32 %v1236, %v1297
      %v1299 = vpop.f32.mrf.mxu0
      %v1300 = vadd.f32 %v1236, %v1299
      %1301 = vmatmul.bf16.gmra.mxu0 %v1258
      %v1302 = vpop.f32.mrf.mxu0
      %v1303 = vadd.f32 %v1236, %v1302
      %v1304 = vpop.f32.mrf.mxu0
      %v1305 = vadd.f32 %v1236, %v1304
      %1306 = vmatmul.bf16.gmra.mxu0 %v1261
      %v1307 = vpop.f32.mrf.mxu0
      %v1308 = vadd.f32 %v1236, %v1307
      %v1309 = vpop.f32.mrf.mxu0
      %v1310 = vadd.f32 %v1236, %v1309
      %1311 = vdwg.mxu0
      %v1312 = vmax.f32 %v1273, 0.0
      %v1313 = vmax.f32 %v1275, 0.0
      %v1314 = vmax.f32 %v1278, 0.0
      %v1315 = vmax.f32 %v1280, 0.0
      %v1316 = vmax.f32 %v1283, 0.0
      %v1317 = vmax.f32 %v1285, 0.0
      %v1318 = vmax.f32 %v1288, 0.0
      %v1319 = vmax.f32 %v1290, 0.0
      %v1320 = vmax.f32 %v1293, 0.0
      %v1321 = vmax.f32 %v1295, 0.0
      %v1322 = vmax.f32 %v1298, 0.0
      %v1323 = vmax.f32 %v1300, 0.0
      %v1324 = vmax.f32 %v1303, 0.0
      %v1325 = vmax.f32 %v1305, 0.0
      %v1326 = vmax.f32 %v1308, 0.0
      %v1327 = vmax.f32 %v1310, 0.0
      %v1328 = vld [vmem:[%s516] sm:$0xff]
      %v1329 = vld [vmem:[%s516 + $0x8] sm:$0xff]
      %v1330 = vld [vmem:[%s516 + $0x10] sm:$0xff]
      %v1331 = vld [vmem:[%s516 + $0x18] sm:$0xff]
      %v1332 = vld [vmem:[%s516 + $0x20] sm:$0xff]
      %v1333 = vld [vmem:[%s516 + $0x28] sm:$0xff]
      %v1334 = vld [vmem:[%s516 + $0x30] sm:$0xff]
      %v1335 = vld [vmem:[%s516 + $0x38] sm:$0xff]
      %v1336 = vld [vmem:[%s516 + $0x40] sm:$0xff]
      %v1337 = vld [vmem:[%s516 + $0x48] sm:$0xff]
      %v1338 = vld [vmem:[%s516 + $0x50] sm:$0xff]
      %v1339 = vld [vmem:[%s516 + $0x58] sm:$0xff]
      %v1340 = vld [vmem:[%s516 + $0x60] sm:$0xff]
      %v1341 = vld [vmem:[%s516 + $0x68] sm:$0xff]
      %v1342 = vld [vmem:[%s516 + $0x70] sm:$0xff]
      %v1343 = vld [vmem:[%s516 + $0x78] sm:$0xff]
      %1345 = vset.pattern.permute.xlu0 0
      %1346 = vperm.xlu0 %1345, %v1328
      %v1347 = vpop.permute.xlu0 %1346
      %1350 = vset.pattern.permute.xlu0 0
      %1351 = vperm.xlu0 %1350, %v1329
      %v1352 = vpop.permute.xlu0 %1351
      %1355 = vset.pattern.permute.xlu0 0
      %1356 = vperm.xlu0 %1355, %v1330
      %v1357 = vpop.permute.xlu0 %1356
      %1360 = vset.pattern.permute.xlu0 0
      %1361 = vperm.xlu0 %1360, %v1331
      %v1362 = vpop.permute.xlu0 %1361
      %1365 = vset.pattern.permute.xlu0 0
      %1366 = vperm.xlu0 %1365, %v1332
      %v1367 = vpop.permute.xlu0 %1366
      %1370 = vset.pattern.permute.xlu0 0
      %1371 = vperm.xlu0 %1370, %v1333
      %v1372 = vpop.permute.xlu0 %1371
      %1375 = vset.pattern.permute.xlu0 0
      %1376 = vperm.xlu0 %1375, %v1334
      %v1377 = vpop.permute.xlu0 %1376
      %1380 = vset.pattern.permute.xlu0 0
      %1381 = vperm.xlu0 %1380, %v1335
      %v1382 = vpop.permute.xlu0 %1381
      %1385 = vset.pattern.permute.xlu0 0
      %1386 = vperm.xlu0 %1385, %v1336
      %v1387 = vpop.permute.xlu0 %1386
      %1390 = vset.pattern.permute.xlu0 0
      %1391 = vperm.xlu0 %1390, %v1337
      %v1392 = vpop.permute.xlu0 %1391
      %1395 = vset.pattern.permute.xlu0 0
      %1396 = vperm.xlu0 %1395, %v1338
      %v1397 = vpop.permute.xlu0 %1396
      %1400 = vset.pattern.permute.xlu0 0
      %1401 = vperm.xlu0 %1400, %v1339
      %v1402 = vpop.permute.xlu0 %1401
      %1405 = vset.pattern.permute.xlu0 0
      %1406 = vperm.xlu0 %1405, %v1340
      %v1407 = vpop.permute.xlu0 %1406
      %1410 = vset.pattern.permute.xlu0 0
      %1411 = vperm.xlu0 %1410, %v1341
      %v1412 = vpop.permute.xlu0 %1411
      %1415 = vset.pattern.permute.xlu0 0
      %1416 = vperm.xlu0 %1415, %v1342
      %v1417 = vpop.permute.xlu0 %1416
      %1420 = vset.pattern.permute.xlu0 0
      %1421 = vperm.xlu0 %1420, %v1343
      %v1422 = vpop.permute.xlu0 %1421
      %v1424 = vmul.f32 %v1312, %v1347
      %v1425 = vmul.f32 %v1313, %v1352
      %v1426 = vmul.f32 %v1314, %v1357
      %v1427 = vmul.f32 %v1315, %v1362
      %v1428 = vmul.f32 %v1316, %v1367
      %v1429 = vmul.f32 %v1317, %v1372
      %v1430 = vmul.f32 %v1318, %v1377
      %v1431 = vmul.f32 %v1319, %v1382
      %v1432 = vmul.f32 %v1320, %v1387
      %v1433 = vmul.f32 %v1321, %v1392
      %v1434 = vmul.f32 %v1322, %v1397
      %v1435 = vmul.f32 %v1323, %v1402
      %v1436 = vmul.f32 %v1324, %v1407
      %v1437 = vmul.f32 %v1325, %v1412
      %v1438 = vmul.f32 %v1326, %v1417
      %v1439 = vmul.f32 %v1327, %v1422
      %v1440 = vld [vmem:[%s522] sm:$0xff]
      %v1441 = vld [vmem:[%s522 + $0x8] sm:$0xff]
      %v1442 = vld [vmem:[%s522 + $0x10] sm:$0xff]
      %v1443 = vld [vmem:[%s522 + $0x18] sm:$0xff]
      %v1444 = vld [vmem:[%s522 + $0x20] sm:$0xff]
      %v1445 = vld [vmem:[%s522 + $0x28] sm:$0xff]
      %v1446 = vld [vmem:[%s522 + $0x30] sm:$0xff]
      %v1447 = vld [vmem:[%s522 + $0x38] sm:$0xff]
      %v1448 = vld [vmem:[%s522 + $0x40] sm:$0xff]
      %v1449 = vld [vmem:[%s522 + $0x48] sm:$0xff]
      %v1450 = vld [vmem:[%s522 + $0x50] sm:$0xff]
      %v1451 = vld [vmem:[%s522 + $0x58] sm:$0xff]
      %v1452 = vld [vmem:[%s522 + $0x60] sm:$0xff]
      %v1453 = vld [vmem:[%s522 + $0x68] sm:$0xff]
      %v1454 = vld [vmem:[%s522 + $0x70] sm:$0xff]
      %v1455 = vld [vmem:[%s522 + $0x78] sm:$0xff]
      %1457 = vset.pattern.permute.xlu0 0
      %1458 = vperm.xlu0 %1457, %v1440
      %v1459 = vpop.permute.xlu0 %1458
      %1462 = vset.pattern.permute.xlu0 0
      %1463 = vperm.xlu0 %1462, %v1441
      %v1464 = vpop.permute.xlu0 %1463
      %1467 = vset.pattern.permute.xlu0 0
      %1468 = vperm.xlu0 %1467, %v1442
      %v1469 = vpop.permute.xlu0 %1468
      %1472 = vset.pattern.permute.xlu0 0
      %1473 = vperm.xlu0 %1472, %v1443
      %v1474 = vpop.permute.xlu0 %1473
      %1477 = vset.pattern.permute.xlu0 0
      %1478 = vperm.xlu0 %1477, %v1444
      %v1479 = vpop.permute.xlu0 %1478
      %1482 = vset.pattern.permute.xlu0 0
      %1483 = vperm.xlu0 %1482, %v1445
      %v1484 = vpop.permute.xlu0 %1483
      %1487 = vset.pattern.permute.xlu0 0
      %1488 = vperm.xlu0 %1487, %v1446
      %v1489 = vpop.permute.xlu0 %1488
      %1492 = vset.pattern.permute.xlu0 0
      %1493 = vperm.xlu0 %1492, %v1447
      %v1494 = vpop.permute.xlu0 %1493
      %1497 = vset.pattern.permute.xlu0 0
      %1498 = vperm.xlu0 %1497, %v1448
      %v1499 = vpop.permute.xlu0 %1498
      %1502 = vset.pattern.permute.xlu0 0
      %1503 = vperm.xlu0 %1502, %v1449
      %v1504 = vpop.permute.xlu0 %1503
      %1507 = vset.pattern.permute.xlu0 0
      %1508 = vperm.xlu0 %1507, %v1450
      %v1509 = vpop.permute.xlu0 %1508
      %1512 = vset.pattern.permute.xlu0 0
      %1513 = vperm.xlu0 %1512, %v1451
      %v1514 = vpop.permute.xlu0 %1513
      %1517 = vset.pattern.permute.xlu0 0
      %1518 = vperm.xlu0 %1517, %v1452
      %v1519 = vpop.permute.xlu0 %1518
      %1522 = vset.pattern.permute.xlu0 0
      %1523 = vperm.xlu0 %1522, %v1453
      %v1524 = vpop.permute.xlu0 %1523
      %1527 = vset.pattern.permute.xlu0 0
      %1528 = vperm.xlu0 %1527, %v1454
      %v1529 = vpop.permute.xlu0 %1528
      %1532 = vset.pattern.permute.xlu0 0
      %1533 = vperm.xlu0 %1532, %v1455
      %v1534 = vpop.permute.xlu0 %1533
      %v1536 = vadd.f32 %v1424, %v1459
      %v1537 = vadd.f32 %v1425, %v1464
      %v1538 = vadd.f32 %v1426, %v1469
      %v1539 = vadd.f32 %v1427, %v1474
      %v1540 = vadd.f32 %v1428, %v1479
      %v1541 = vadd.f32 %v1429, %v1484
      %v1542 = vadd.f32 %v1430, %v1489
      %v1543 = vadd.f32 %v1431, %v1494
      %v1544 = vadd.f32 %v1432, %v1499
      %v1545 = vadd.f32 %v1433, %v1504
      %v1546 = vadd.f32 %v1434, %v1509
      %v1547 = vadd.f32 %v1435, %v1514
      %v1548 = vadd.f32 %v1436, %v1519
      %v1549 = vadd.f32 %v1437, %v1524
      %v1550 = vadd.f32 %v1438, %v1529
      %v1551 = vadd.f32 %v1439, %v1534
      %1552 = vst.msk [vmem:[%s532] sm:$0xff] %vm1238, %v1536
      %1553 = vst.msk [vmem:[%s532 + $0x8] sm:$0xff] %vm1238, %v1537
      %1554 = vst.msk [vmem:[%s532 + $0x10] sm:$0xff] %vm1238, %v1538
      %1555 = vst.msk [vmem:[%s532 + $0x18] sm:$0xff] %vm1238, %v1539
      %1556 = vst.msk [vmem:[%s532 + $0x20] sm:$0xff] %vm1238, %v1540
      %1557 = vst.msk [vmem:[%s532 + $0x28] sm:$0xff] %vm1238, %v1541
      %1558 = vst.msk [vmem:[%s532 + $0x30] sm:$0xff] %vm1238, %v1542
      %1559 = vst.msk [vmem:[%s532 + $0x38] sm:$0xff] %vm1238, %v1543
      %1560 = vst.msk [vmem:[%s532 + $0x40] sm:$0xff] %vm1238, %v1544
      %1561 = vst.msk [vmem:[%s532 + $0x48] sm:$0xff] %vm1238, %v1545
      %1562 = vst.msk [vmem:[%s532 + $0x50] sm:$0xff] %vm1238, %v1546
      %1563 = vst.msk [vmem:[%s532 + $0x58] sm:$0xff] %vm1238, %v1547
      %1564 = vst.msk [vmem:[%s532 + $0x60] sm:$0xff] %vm1238, %v1548
      %1565 = vst.msk [vmem:[%s532 + $0x68] sm:$0xff] %vm1238, %v1549
      %1566 = vst.msk [vmem:[%s532 + $0x70] sm:$0xff] %vm1238, %v1550
      %1567 = vst.msk [vmem:[%s532 + $0x78] sm:$0xff] %vm1238, %v1551
      %s1568 = smul.u32 16, %s27
      %p1569 = scmp.lt.s32.totalorder %s26, 1
      %s1570 = scalar_select %p1569, %s26, 1
      %p1571 = scmp.lt.s32.totalorder %s1568, 15
      %s1572 = scalar_select %p1571, %s1568, 15
      %s1573 = smul.addr %s1570, 16
      %s1574 = sadd.s32 %s1572, %s1573
      %s1575 = smul.addr %s1574, 8
      %s1576 = scalar_lea.vmem %s11, %s1575
      // Predicated region
      $region65: #{tpu_custom_call.1} parent=63 // pred_check
        %p1577 = pneg %p317
      $region66: #{tpu_custom_call.1} parent=63 // pred_check_branch
        %1579 = sbr.rel (%p1577) target = $region68
      $region67: #{tpu_custom_call.1} parent=63 // pred_region
        %s1580 = smul.u32 16, %s27
      $region68: #{tpu_custom_call.1} parent=63 // pred_fallthru
        _
    $region64: #{tpu_custom_call.1} parent=5 // pred_fallthru
      _
    %p1581 = scmp.le.s32.totalorder 2, %s17
    // Predicated region
    $region69: #{tpu_custom_call.1} parent=5 // pred_check
      %p1582 = pneg %p1581
    $region70: #{tpu_custom_call.1} parent=5 // pred_check_branch
      %1584 = sbr.rel (%p1582) target = $region72
    $region71: #{tpu_custom_call.1} parent=5 // pred_region
      %s1585 = ssub.s32 %s17, 2
      // Predicated region
      $region73: #{tpu_custom_call.1} parent=71 // pred_check
        %p1586 = pneg %p323
      $region74: #{tpu_custom_call.1} parent=71 // pred_check_branch
        %1588 = sbr.rel (%p1586) target = $region76
      $region75: #{tpu_custom_call.1} parent=71 // pred_region
        %s1589 = smul.u32 16, %s29
        %p1590 = scmp.lt.s32.totalorder %s28, 1
        %s1591 = scalar_select %p1590, %s28, 1
        %p1592 = scmp.lt.s32.totalorder %s1589, 15
        %s1593 = scalar_select %p1592, %s1589, 15
        %s1594 = smul.addr %s1591, 16
        %s1595 = sadd.s32 %s1593, %s1594
        %s1596 = smul.addr %s1595, 8
        %s1597 = scalar_lea.vmem %s11, %s1596
      $region76: #{tpu_custom_call.1} parent=71 // pred_fallthru
        _
    $region72: #{tpu_custom_call.1} parent=5 // pred_fallthru
      _
  $region6: #{tpu_custom_call.1} parent=0 // loop_footer
    %s21 = sadd.s32 1, %s17
  $region7: #{tpu_custom_call.1} parent=0 // loop_footer_branch
    %16 = sbr.rel target = $region3
  $region8: #{tpu_custom_call.1} parent=0 // loop_exit
    _

</llo_original>
